<compile_context>
chip_gen: v6e
topology: v6e:2x2x1
jax: 0.10.0
libtpu: 0.0.40
codegen_flags: <defaults>
</compile_context>

<pallas_src>
import math

import jax
import jax.numpy as jnp
from jax.experimental import pallas as pl
from jax.experimental.pallas import tpu as pltpu

# ---- module hyper-parameters (MultiHeadAttention(h=8, d_model=32)) ---------
D_MODEL = 32
HEADS = 8
D_K = D_MODEL // HEADS

BATCH = 2
SEQ = 8
ROWS = BATCH * SEQ


# ---------------------------------------------------------------------------
# Pallas kernel: whole batch, all heads, in ONE invocation
# ---------------------------------------------------------------------------
def mha_kernel(q_ref, k_ref, v_ref, mask_ref,
               wq_ref, bq_ref, wk_ref, bk_ref, wv_ref, bv_ref, wo_ref, bo_ref,
               out_ref):
    q_in = q_ref[...]                      # (B*S, D) flattened query slab
    k_in = k_ref[...]                      # (B*S, D)
    v_in = v_ref[...]                      # (B*S, D)
    neg_mask = mask_ref[...]               # (B*S, B*S): 0 in-batch, -1e9 cross-batch

    scale = 1.0 / math.sqrt(D_K)

    # input projections (nn.Linear, x @ W + b layout); 1/sqrt(d_k) folded into q once
    q = (jnp.dot(q_in, wq_ref[...], preferred_element_type=jnp.float32)
         + bq_ref[...]) * scale
    k = jnp.dot(k_in, wk_ref[...], preferred_element_type=jnp.float32) + bk_ref[...]
    v = jnp.dot(v_in, wv_ref[...], preferred_element_type=jnp.float32) + bv_ref[...]

    # head-batched tensors (H, B*S, D_K) via static lane slices
    qh = jnp.stack([q[:, h * D_K:(h + 1) * D_K] for h in range(HEADS)], axis=0)
    kh = jnp.stack([k[:, h * D_K:(h + 1) * D_K] for h in range(HEADS)], axis=0)
    vh = jnp.stack([v[:, h * D_K:(h + 1) * D_K] for h in range(HEADS)], axis=0)

    # batched scores / softmax / context; block-diag mask keeps batches separate
    s = jnp.einsum('hqd,hkd->hqk', qh, kh,
                   preferred_element_type=jnp.float32)           # (H, B*S, B*S)
    s = s + neg_mask[None, :, :]
    # TODO(synk): user-supplied attention mask (masked_fill) not plumbed through;
    #             the forward default mask=None is what is implemented.
    m = jnp.max(s, axis=-1, keepdims=True)
    p = jnp.exp(s - m)
    denom = jnp.sum(p, axis=-1, keepdims=True)
    ctx = jnp.einsum('hqk,hkd->hqd', p, vh,
                     preferred_element_type=jnp.float32)          # (H, B*S, D_K)
    ctx = ctx / denom                       # exact normalization (fixes prior mismatch)
    # TODO(synk): nn.Dropout(p=0.1) on p_attn is identity at inference — omitted.

    # concat heads -> single output projection
    o = jnp.concatenate([ctx[h] for h in range(HEADS)], axis=-1)  # (B*S, D)
    out_ref[...] = (jnp.dot(o, wo_ref[...], preferred_element_type=jnp.float32)
                    + bo_ref[...])


def multi_head_attention(query, key, value, params):
    B, S, D = query.shape
    assert D == D_MODEL
    rows = B * S
    q2 = query.reshape(rows, D)
    k2 = key.reshape(rows, D)
    v2 = value.reshape(rows, D)

    # additive block-diagonal mask so batch elements don't attend to each other
    rid = jnp.arange(rows) // S
    neg_mask = jnp.where(rid[:, None] == rid[None, :], 0.0, -1e9).astype(jnp.float32)

    args = (q2, k2, v2, neg_mask,
            params["wq"], params["bq"].reshape(1, D),
            params["wk"], params["bk"].reshape(1, D),
            params["wv"], params["bv"].reshape(1, D),
            params["wo"], params["bo"].reshape(1, D))

    vmem_spec = pl.BlockSpec(memory_space=pltpu.MemorySpace.VMEM)  # whole array in VMEM

    out2d = pl.pallas_call(
        mha_kernel,
        out_shape=jax.ShapeDtypeStruct((rows, D), jnp.float32),
        in_specs=[vmem_spec] * len(args),
        out_specs=vmem_spec,
        # no grid: a single invocation; all operands (~20 KB) fit VMEM on v5e/v6e/v7x.
    )(*args)
    return out2d.reshape(B, S, D)


# ---------------------------------------------------------------------------
# deterministic parameter initialization (synthetic, not a checkpoint load)
# weights are stored in x @ W orientation (i.e. torch linear.weight transposed)
# ---------------------------------------------------------------------------
def init_params(key):
    ks = jax.random.split(key, 8)

    def lin_w(k):
        return jax.random.normal(k, (D_MODEL, D_MODEL), jnp.float32) / math.sqrt(D_MODEL)

    def lin_b(k):
        return 0.1 * jax.random.normal(k, (D_MODEL,), jnp.float32)

    return dict(wq=lin_w(ks[0]), bq=lin_b(ks[1]),
                wk=lin_w(ks[2]), bk=lin_b(ks[3]),
                wv=lin_w(ks[4]), bv=lin_b(ks[5]),
                wo=lin_w(ks[6]), bo=lin_b(ks[7]))


# ---------------------------------------------------------------------------
# pure-JAX reference mirroring the PyTorch forward (mask=None, dropout=identity)
# ---------------------------------------------------------------------------
def reference_mha(query, key, value, p):
    B, S, D = query.shape

    def proj(x, w, b):
        return (x @ w + b).reshape(B, S, HEADS, D_K).transpose(0, 2, 1, 3)  # (B,H,S,dk)

    qh = proj(query, p["wq"], p["bq"])
    kh = proj(key, p["wk"], p["bk"])
    vh = proj(value, p["wv"], p["bv"])
    s = jnp.einsum('bhqd,bhkd->bhqk', qh, kh) / math.sqrt(D_K)
    attn = jax.nn.softmax(s, axis=-1)
    o = jnp.einsum('bhqk,bhkd->bhqd', attn, vh).transpose(0, 2, 1, 3).reshape(B, S, D)
    return o @ p["wo"] + p["bo"]


if __name__ == "__main__":
    key = jax.random.PRNGKey(0)
    kq, kk, kv, kp = jax.random.split(key, 4)
    q = jax.random.normal(kq, (BATCH, SEQ, D_MODEL), jnp.float32)
    k = jax.random.normal(kk, (BATCH, SEQ, D_MODEL), jnp.float32)
    v = jax.random.normal(kv, (BATCH, SEQ, D_MODEL), jnp.float32)
    params = init_params(kp)

    out = jax.block_until_ready(multi_head_attention(q, k, v, params))
    ref = jax.block_until_ready(reference_mha(q, k, v, params))

    assert out.shape == (BATCH, SEQ, D_MODEL)
    assert jnp.allclose(out, ref, rtol=1e-4, atol=1e-4), "mismatch vs JAX reference"

    print("KERNEL_OK")
</pallas_src>

<mosaic_0001>
module attributes {stable_mosaic.version = 11 : i64} {
  func.func @mha_kernel(%arg0: memref<16x32xf32, #tpu.memory_space<vmem>>, %arg1: memref<16x32xf32, #tpu.memory_space<vmem>>, %arg2: memref<16x32xf32, #tpu.memory_space<vmem>>, %arg3: memref<16x16xf32, #tpu.memory_space<vmem>>, %arg4: memref<32x32xf32, #tpu.memory_space<vmem>>, %arg5: memref<1x32xf32, #tpu.memory_space<vmem>>, %arg6: memref<32x32xf32, #tpu.memory_space<vmem>>, %arg7: memref<1x32xf32, #tpu.memory_space<vmem>>, %arg8: memref<32x32xf32, #tpu.memory_space<vmem>>, %arg9: memref<1x32xf32, #tpu.memory_space<vmem>>, %arg10: memref<32x32xf32, #tpu.memory_space<vmem>>, %arg11: memref<1x32xf32, #tpu.memory_space<vmem>>, %arg12: memref<16x32xf32, #tpu.memory_space<vmem>>) attributes {dimension_semantics = [], scalar_prefetch = 0 : i64, scratch_operands = 0 : i64, tpu.core_type = #tpu.core_type<tc>} {
    %c0 = arith.constant 0 : index
    %c0_0 = arith.constant 0 : index
    %0 = vector.load %arg0[%c0, %c0_0] : memref<16x32xf32, #tpu.memory_space<vmem>>, vector<16x32xf32>
    %c0_1 = arith.constant 0 : index
    %c0_2 = arith.constant 0 : index
    %1 = vector.load %arg1[%c0_1, %c0_2] : memref<16x32xf32, #tpu.memory_space<vmem>>, vector<16x32xf32>
    %c0_3 = arith.constant 0 : index
    %c0_4 = arith.constant 0 : index
    %2 = vector.load %arg2[%c0_3, %c0_4] : memref<16x32xf32, #tpu.memory_space<vmem>>, vector<16x32xf32>
    %c0_5 = arith.constant 0 : index
    %c0_6 = arith.constant 0 : index
    %3 = vector.load %arg3[%c0_5, %c0_6] : memref<16x16xf32, #tpu.memory_space<vmem>>, vector<16x16xf32>
    %c0_7 = arith.constant 0 : index
    %c0_8 = arith.constant 0 : index
    %4 = vector.load %arg4[%c0_7, %c0_8] : memref<32x32xf32, #tpu.memory_space<vmem>>, vector<32x32xf32>
    %cst = arith.constant dense<0.000000e+00> : vector<16x32xf32>
    %5 = tpu.matmul %0, %4, %cst {dimension_numbers = #tpu.dot_dimension_numbers<[1], [0], [0], [1], [0, 0, 1, 1], [], []>} : vector<16x32xf32>, vector<32x32xf32>, vector<16x32xf32> -> vector<16x32xf32>
    %c0_9 = arith.constant 0 : index
    %c0_10 = arith.constant 0 : index
    %6 = vector.load %arg5[%c0_9, %c0_10] : memref<1x32xf32, #tpu.memory_space<vmem>>, vector<1x32xf32>
    %7 = vector.broadcast %6 : vector<1x32xf32> to vector<16x32xf32>
    %8 = arith.addf %5, %7 : vector<16x32xf32>
    %cst_11 = arith.constant 5.000000e-01 : f32
    %9 = vector.broadcast %cst_11 : f32 to vector<16x32xf32>
    %10 = arith.mulf %8, %9 : vector<16x32xf32>
    %c0_12 = arith.constant 0 : index
    %c0_13 = arith.constant 0 : index
    %11 = vector.load %arg6[%c0_12, %c0_13] : memref<32x32xf32, #tpu.memory_space<vmem>>, vector<32x32xf32>
    %cst_14 = arith.constant dense<0.000000e+00> : vector<16x32xf32>
    %12 = tpu.matmul %1, %11, %cst_14 {dimension_numbers = #tpu.dot_dimension_numbers<[1], [0], [0], [1], [0, 0, 1, 1], [], []>} : vector<16x32xf32>, vector<32x32xf32>, vector<16x32xf32> -> vector<16x32xf32>
    %c0_15 = arith.constant 0 : index
    %c0_16 = arith.constant 0 : index
    %13 = vector.load %arg7[%c0_15, %c0_16] : memref<1x32xf32, #tpu.memory_space<vmem>>, vector<1x32xf32>
    %14 = vector.broadcast %13 : vector<1x32xf32> to vector<16x32xf32>
    %15 = arith.addf %12, %14 : vector<16x32xf32>
    %c0_17 = arith.constant 0 : index
    %c0_18 = arith.constant 0 : index
    %16 = vector.load %arg8[%c0_17, %c0_18] : memref<32x32xf32, #tpu.memory_space<vmem>>, vector<32x32xf32>
    %cst_19 = arith.constant dense<0.000000e+00> : vector<16x32xf32>
    %17 = tpu.matmul %2, %16, %cst_19 {dimension_numbers = #tpu.dot_dimension_numbers<[1], [0], [0], [1], [0, 0, 1, 1], [], []>} : vector<16x32xf32>, vector<32x32xf32>, vector<16x32xf32> -> vector<16x32xf32>
    %c0_20 = arith.constant 0 : index
    %c0_21 = arith.constant 0 : index
    %18 = vector.load %arg9[%c0_20, %c0_21] : memref<1x32xf32, #tpu.memory_space<vmem>>, vector<1x32xf32>
    %19 = vector.broadcast %18 : vector<1x32xf32> to vector<16x32xf32>
    %20 = arith.addf %17, %19 : vector<16x32xf32>
    %21 = vector.extract_strided_slice %10 {offsets = [0, 0], sizes = [16, 4], strides = [1, 1]} : vector<16x32xf32> to vector<16x4xf32>
    %22 = vector.extract_strided_slice %10 {offsets = [0, 4], sizes = [16, 4], strides = [1, 1]} : vector<16x32xf32> to vector<16x4xf32>
    %23 = vector.extract_strided_slice %10 {offsets = [0, 8], sizes = [16, 4], strides = [1, 1]} : vector<16x32xf32> to vector<16x4xf32>
    %24 = vector.extract_strided_slice %10 {offsets = [0, 12], sizes = [16, 4], strides = [1, 1]} : vector<16x32xf32> to vector<16x4xf32>
    %25 = vector.extract_strided_slice %10 {offsets = [0, 16], sizes = [16, 4], strides = [1, 1]} : vector<16x32xf32> to vector<16x4xf32>
    %26 = vector.extract_strided_slice %10 {offsets = [0, 20], sizes = [16, 4], strides = [1, 1]} : vector<16x32xf32> to vector<16x4xf32>
    %27 = vector.extract_strided_slice %10 {offsets = [0, 24], sizes = [16, 4], strides = [1, 1]} : vector<16x32xf32> to vector<16x4xf32>
    %28 = vector.extract_strided_slice %10 {offsets = [0, 28], sizes = [16, 4], strides = [1, 1]} : vector<16x32xf32> to vector<16x4xf32>
    %29 = vector.shape_cast %21 : vector<16x4xf32> to vector<1x16x4xf32>
    %30 = vector.shape_cast %22 : vector<16x4xf32> to vector<1x16x4xf32>
    %31 = vector.shape_cast %23 : vector<16x4xf32> to vector<1x16x4xf32>
    %32 = vector.shape_cast %24 : vector<16x4xf32> to vector<1x16x4xf32>
    %33 = vector.shape_cast %25 : vector<16x4xf32> to vector<1x16x4xf32>
    %34 = vector.shape_cast %26 : vector<16x4xf32> to vector<1x16x4xf32>
    %35 = vector.shape_cast %27 : vector<16x4xf32> to vector<1x16x4xf32>
    %36 = vector.shape_cast %28 : vector<16x4xf32> to vector<1x16x4xf32>
    %37 = tpu.concatenate %29, %30, %31, %32, %33, %34, %35, %36 in 0 : vector<1x16x4xf32>, vector<1x16x4xf32>, vector<1x16x4xf32>, vector<1x16x4xf32>, vector<1x16x4xf32>, vector<1x16x4xf32>, vector<1x16x4xf32>, vector<1x16x4xf32> -> vector<8x16x4xf32>
    %38 = vector.extract_strided_slice %15 {offsets = [0, 0], sizes = [16, 4], strides = [1, 1]} : vector<16x32xf32> to vector<16x4xf32>
    %39 = vector.extract_strided_slice %15 {offsets = [0, 4], sizes = [16, 4], strides = [1, 1]} : vector<16x32xf32> to vector<16x4xf32>
    %40 = vector.extract_strided_slice %15 {offsets = [0, 8], sizes = [16, 4], strides = [1, 1]} : vector<16x32xf32> to vector<16x4xf32>
    %41 = vector.extract_strided_slice %15 {offsets = [0, 12], sizes = [16, 4], strides = [1, 1]} : vector<16x32xf32> to vector<16x4xf32>
    %42 = vector.extract_strided_slice %15 {offsets = [0, 16], sizes = [16, 4], strides = [1, 1]} : vector<16x32xf32> to vector<16x4xf32>
    %43 = vector.extract_strided_slice %15 {offsets = [0, 20], sizes = [16, 4], strides = [1, 1]} : vector<16x32xf32> to vector<16x4xf32>
    %44 = vector.extract_strided_slice %15 {offsets = [0, 24], sizes = [16, 4], strides = [1, 1]} : vector<16x32xf32> to vector<16x4xf32>
    %45 = vector.extract_strided_slice %15 {offsets = [0, 28], sizes = [16, 4], strides = [1, 1]} : vector<16x32xf32> to vector<16x4xf32>
    %46 = vector.shape_cast %38 : vector<16x4xf32> to vector<1x16x4xf32>
    %47 = vector.shape_cast %39 : vector<16x4xf32> to vector<1x16x4xf32>
    %48 = vector.shape_cast %40 : vector<16x4xf32> to vector<1x16x4xf32>
    %49 = vector.shape_cast %41 : vector<16x4xf32> to vector<1x16x4xf32>
    %50 = vector.shape_cast %42 : vector<16x4xf32> to vector<1x16x4xf32>
    %51 = vector.shape_cast %43 : vector<16x4xf32> to vector<1x16x4xf32>
    %52 = vector.shape_cast %44 : vector<16x4xf32> to vector<1x16x4xf32>
    %53 = vector.shape_cast %45 : vector<16x4xf32> to vector<1x16x4xf32>
    %54 = tpu.concatenate %46, %47, %48, %49, %50, %51, %52, %53 in 0 : vector<1x16x4xf32>, vector<1x16x4xf32>, vector<1x16x4xf32>, vector<1x16x4xf32>, vector<1x16x4xf32>, vector<1x16x4xf32>, vector<1x16x4xf32>, vector<1x16x4xf32> -> vector<8x16x4xf32>
    %55 = vector.extract_strided_slice %20 {offsets = [0, 0], sizes = [16, 4], strides = [1, 1]} : vector<16x32xf32> to vector<16x4xf32>
    %56 = vector.extract_strided_slice %20 {offsets = [0, 4], sizes = [16, 4], strides = [1, 1]} : vector<16x32xf32> to vector<16x4xf32>
    %57 = vector.extract_strided_slice %20 {offsets = [0, 8], sizes = [16, 4], strides = [1, 1]} : vector<16x32xf32> to vector<16x4xf32>
    %58 = vector.extract_strided_slice %20 {offsets = [0, 12], sizes = [16, 4], strides = [1, 1]} : vector<16x32xf32> to vector<16x4xf32>
    %59 = vector.extract_strided_slice %20 {offsets = [0, 16], sizes = [16, 4], strides = [1, 1]} : vector<16x32xf32> to vector<16x4xf32>
    %60 = vector.extract_strided_slice %20 {offsets = [0, 20], sizes = [16, 4], strides = [1, 1]} : vector<16x32xf32> to vector<16x4xf32>
    %61 = vector.extract_strided_slice %20 {offsets = [0, 24], sizes = [16, 4], strides = [1, 1]} : vector<16x32xf32> to vector<16x4xf32>
    %62 = vector.extract_strided_slice %20 {offsets = [0, 28], sizes = [16, 4], strides = [1, 1]} : vector<16x32xf32> to vector<16x4xf32>
    %63 = vector.shape_cast %55 : vector<16x4xf32> to vector<1x16x4xf32>
    %64 = vector.shape_cast %56 : vector<16x4xf32> to vector<1x16x4xf32>
    %65 = vector.shape_cast %57 : vector<16x4xf32> to vector<1x16x4xf32>
    %66 = vector.shape_cast %58 : vector<16x4xf32> to vector<1x16x4xf32>
    %67 = vector.shape_cast %59 : vector<16x4xf32> to vector<1x16x4xf32>
    %68 = vector.shape_cast %60 : vector<16x4xf32> to vector<1x16x4xf32>
    %69 = vector.shape_cast %61 : vector<16x4xf32> to vector<1x16x4xf32>
    %70 = vector.shape_cast %62 : vector<16x4xf32> to vector<1x16x4xf32>
    %71 = tpu.concatenate %63, %64, %65, %66, %67, %68, %69, %70 in 0 : vector<1x16x4xf32>, vector<1x16x4xf32>, vector<1x16x4xf32>, vector<1x16x4xf32>, vector<1x16x4xf32>, vector<1x16x4xf32>, vector<1x16x4xf32>, vector<1x16x4xf32> -> vector<8x16x4xf32>
    "tpu.trace_start"() <{level = 10 : i32, message = "hqd,hkd->hqk"}> : () -> ()
    %cst_22 = arith.constant dense<0.000000e+00> : vector<8x16x16xf32>
    %72 = tpu.matmul %37, %54, %cst_22 {dimension_numbers = #tpu.dot_dimension_numbers<[2], [2], [1], [1], [0, 0, 0, 1, 1, 1], [0], [0]>} : vector<8x16x4xf32>, vector<8x16x4xf32>, vector<8x16x16xf32> -> vector<8x16x16xf32>
    "tpu.trace_stop"() : () -> ()
    %73 = vector.shape_cast %3 : vector<16x16xf32> to vector<1x16x16xf32>
    %74 = vector.broadcast %73 : vector<1x16x16xf32> to vector<8x16x16xf32>
    %75 = arith.addf %72, %74 : vector<8x16x16xf32>
    %cst_23 = arith.constant dense<0xFF800000> : vector<8x16xf32>
    %76 = vector.multi_reduction <maximumf>, %75, %cst_23 [2] : vector<8x16x16xf32> to vector<8x16xf32>
    %77 = vector.shape_cast %76 : vector<8x16xf32> to vector<8x16x1xf32>
    %78 = vector.broadcast %77 : vector<8x16x1xf32> to vector<8x16x16xf32>
    %79 = arith.subf %75, %78 : vector<8x16x16xf32>
    %80 = math.exp %79 : vector<8x16x16xf32>
    %cst_24 = arith.constant dense<0.000000e+00> : vector<8x16xf32>
    %81 = vector.multi_reduction <add>, %80, %cst_24 [2] : vector<8x16x16xf32> to vector<8x16xf32>
    %82 = vector.shape_cast %81 : vector<8x16xf32> to vector<8x16x1xf32>
    "tpu.trace_start"() <{level = 10 : i32, message = "hqk,hkd->hqd"}> : () -> ()
    %cst_25 = arith.constant dense<0.000000e+00> : vector<8x16x4xf32>
    %83 = tpu.matmul %80, %71, %cst_25 {dimension_numbers = #tpu.dot_dimension_numbers<[2], [1], [1], [2], [0, 0, 0, 1, 1, 2], [0], [0]>} : vector<8x16x16xf32>, vector<8x16x4xf32>, vector<8x16x4xf32> -> vector<8x16x4xf32>
    "tpu.trace_stop"() : () -> ()
    %84 = vector.broadcast %82 : vector<8x16x1xf32> to vector<8x16x4xf32>
    %85 = arith.divf %83, %84 : vector<8x16x4xf32>
    %86 = vector.extract_strided_slice %85 {offsets = [0, 0, 0], sizes = [1, 16, 4], strides = [1, 1, 1]} : vector<8x16x4xf32> to vector<1x16x4xf32>
    %87 = vector.shape_cast %86 : vector<1x16x4xf32> to vector<16x4xf32>
    %88 = vector.extract_strided_slice %85 {offsets = [1, 0, 0], sizes = [1, 16, 4], strides = [1, 1, 1]} : vector<8x16x4xf32> to vector<1x16x4xf32>
    %89 = vector.shape_cast %88 : vector<1x16x4xf32> to vector<16x4xf32>
    %90 = vector.extract_strided_slice %85 {offsets = [2, 0, 0], sizes = [1, 16, 4], strides = [1, 1, 1]} : vector<8x16x4xf32> to vector<1x16x4xf32>
    %91 = vector.shape_cast %90 : vector<1x16x4xf32> to vector<16x4xf32>
    %92 = vector.extract_strided_slice %85 {offsets = [3, 0, 0], sizes = [1, 16, 4], strides = [1, 1, 1]} : vector<8x16x4xf32> to vector<1x16x4xf32>
    %93 = vector.shape_cast %92 : vector<1x16x4xf32> to vector<16x4xf32>
    %94 = vector.extract_strided_slice %85 {offsets = [4, 0, 0], sizes = [1, 16, 4], strides = [1, 1, 1]} : vector<8x16x4xf32> to vector<1x16x4xf32>
    %95 = vector.shape_cast %94 : vector<1x16x4xf32> to vector<16x4xf32>
    %96 = vector.extract_strided_slice %85 {offsets = [5, 0, 0], sizes = [1, 16, 4], strides = [1, 1, 1]} : vector<8x16x4xf32> to vector<1x16x4xf32>
    %97 = vector.shape_cast %96 : vector<1x16x4xf32> to vector<16x4xf32>
    %98 = vector.extract_strided_slice %85 {offsets = [6, 0, 0], sizes = [1, 16, 4], strides = [1, 1, 1]} : vector<8x16x4xf32> to vector<1x16x4xf32>
    %99 = vector.shape_cast %98 : vector<1x16x4xf32> to vector<16x4xf32>
    %100 = vector.extract_strided_slice %85 {offsets = [7, 0, 0], sizes = [1, 16, 4], strides = [1, 1, 1]} : vector<8x16x4xf32> to vector<1x16x4xf32>
    %101 = vector.shape_cast %100 : vector<1x16x4xf32> to vector<16x4xf32>
    %102 = tpu.concatenate %87, %89, %91, %93, %95, %97, %99, %101 in 1 : vector<16x4xf32>, vector<16x4xf32>, vector<16x4xf32>, vector<16x4xf32>, vector<16x4xf32>, vector<16x4xf32>, vector<16x4xf32>, vector<16x4xf32> -> vector<16x32xf32>
    %c0_26 = arith.constant 0 : index
    %c0_27 = arith.constant 0 : index
    %103 = vector.load %arg10[%c0_26, %c0_27] : memref<32x32xf32, #tpu.memory_space<vmem>>, vector<32x32xf32>
    %cst_28 = arith.constant dense<0.000000e+00> : vector<16x32xf32>
    %104 = tpu.matmul %102, %103, %cst_28 {dimension_numbers = #tpu.dot_dimension_numbers<[1], [0], [0], [1], [0, 0, 1, 1], [], []>} : vector<16x32xf32>, vector<32x32xf32>, vector<16x32xf32> -> vector<16x32xf32>
    %c0_29 = arith.constant 0 : index
    %c0_30 = arith.constant 0 : index
    %105 = vector.load %arg11[%c0_29, %c0_30] : memref<1x32xf32, #tpu.memory_space<vmem>>, vector<1x32xf32>
    %106 = vector.broadcast %105 : vector<1x32xf32> to vector<16x32xf32>
    %107 = arith.addf %104, %106 : vector<16x32xf32>
    %c0_31 = arith.constant 0 : index
    %c0_32 = arith.constant 0 : index
    %108 = vector.load %arg12[%c0_31, %c0_32] : memref<16x32xf32, #tpu.memory_space<vmem>>, vector<16x32xf32>
    tpu.vector_store %arg12[%c0_31, %c0_32], %107 {strides = array<i32>} : memref<16x32xf32, #tpu.memory_space<vmem>>, vector<16x32xf32>,
    return
  }
}

</mosaic_0001>

<llo_original>
// kernel: tpu_custom_call.1
$region0: #{tpu_custom_call.1}
  #allocation0 [shape = 'u32[]', space=smem, size = 0x4, offset = 0x4, fixed_abs, tag = 'smem constant byte address 0x4 - core index']
  #allocation1 [shape = 'u32[144,128]{1,0:T(1,128)}', space=vmem, size = 0x12000, scoped, tag = 'internal scratch']
  %s0 = inlined_call_operand.hbm [shape: f32[16,32], index: 0, kind: input, shape index: {}]
  %s1 = inlined_call_operand.hbm [shape: f32[16,32], index: 1, kind: input, shape index: {}]
  %s2 = inlined_call_operand.hbm [shape: f32[16,32], index: 2, kind: input, shape index: {}]
  %s3 = inlined_call_operand.hbm [shape: f32[16,16], index: 3, kind: input, shape index: {}]
  %s4 = inlined_call_operand.hbm [shape: f32[32,32], index: 4, kind: input, shape index: {}]
  %s5 = inlined_call_operand.vmem [shape: f32[1,32], index: 5, kind: input, shape index: {}]
  %s6 = inlined_call_operand.hbm [shape: f32[32,32], index: 6, kind: input, shape index: {}]
  %s7 = inlined_call_operand.vmem [shape: f32[1,32], index: 7, kind: input, shape index: {}]
  %s8 = inlined_call_operand.hbm [shape: f32[32,32], index: 8, kind: input, shape index: {}]
  %s9 = inlined_call_operand.vmem [shape: f32[1,32], index: 9, kind: input, shape index: {}]
  %s10 = inlined_call_operand.hbm [shape: f32[32,32], index: 10, kind: input, shape index: {}]
  %s11 = inlined_call_operand.vmem [shape: f32[1,32], index: 11, kind: input, shape index: {}]
  %s12 = inlined_call_operand.hbm [shape: f32[16,32], index: 12, kind: output, shape index: {}]
  %s13 = sld [smem:[#allocation0]]
  $region90: #{tpu_custom_call.1} parent=0
    _
  %s15 = ssub.s32 1, %s13
  %s16 = scalar_select 0, %s15, %s13
  $region1: #{tpu_custom_call.1} parent=0
    #allocation2 [shape = 'u8[8192]{0}', space=vmem, size = 0x2000, scoped, tag = 'input window, operand 0, single buffered']
    #allocation3 [shape = 's32[1]{0}', space=sflag, size = 0x4, scoped, tag = 'scoped memory for tpu_custom_call.1']
    #allocation4 [shape = 's32[1]{0}', space=sflag, size = 0x4, scoped, tag = 'scoped memory for tpu_custom_call.1']
    #allocation5 [shape = 'u8[8192]{0}', space=vmem, size = 0x2000, scoped, tag = 'input window, operand 1, single buffered']
    #allocation6 [shape = 's32[1]{0}', space=sflag, size = 0x4, scoped, tag = 'scoped memory for tpu_custom_call.1']
    #allocation7 [shape = 'u8[8192]{0}', space=vmem, size = 0x2000, scoped, tag = 'input window, operand 2, single buffered']
    #allocation8 [shape = 'u8[8192]{0}', space=vmem, size = 0x2000, scoped, tag = 'input window, operand 3, single buffered']
    #allocation9 [shape = 's32[1]{0}', space=sflag, size = 0x4, scoped, tag = 'scoped memory for tpu_custom_call.1']
    #allocation10 [shape = 'u8[16384]{0}', space=vmem, size = 0x4000, scoped, tag = 'input window, operand 4, single buffered']
    #allocation11 [shape = 'u8[16384]{0}', space=vmem, size = 0x4000, scoped, tag = 'input window, operand 6, single buffered']
    #allocation12 [shape = 's32[1]{0}', space=sflag, size = 0x4, scoped, tag = 'scoped memory for tpu_custom_call.1']
    #allocation13 [shape = 'u8[16384]{0}', space=vmem, size = 0x4000, scoped, tag = 'input window, operand 8, single buffered']
    #allocation14 [shape = 'u8[16384]{0}', space=vmem, size = 0x4000, scoped, tag = 'input window, operand 10, single buffered']
    #allocation15 [shape = 's32[1]{0}', space=sflag, size = 0x4, scoped, tag = 'scoped memory for tpu_custom_call.1']
    #allocation16 [shape = 'u8[8192]{0}', space=vmem, size = 0x2000, scoped, tag = 'output window, operand 0, single buffered']
    %17 = vsyncpa [#allocation3], 0
    %18 = vsyncpa [#allocation6], 0
    %19 = vsyncpa [#allocation9], 0
    %20 = vsyncpa [#allocation12], 0
    %21 = vsyncpa [#allocation15], 0
    %22 = vsyncpa [#allocation4], 0
    // Predicated region
    $region2: #{tpu_custom_call.1} parent=1 // pred_check
      _
    $region3: #{tpu_custom_call.1} parent=1 // pred_check_branch
      %24 = sbr.rel (0) target = $region5
    $region4: #{tpu_custom_call.1} parent=1 // pred_region
      %s26 = ssub.s32 256, 256
      %27 = vsyncadd [#allocation3], %s26
      %s28 = sshll.u32 [#allocation2], 4
      %s29 = int_to_ptr.vmem [resolvable:$true] %s28
      %34 = dma.hbm_to_vmem [thread:$0]  %s0, 256, %s29, [#allocation3], 128, 128, 8
    $region5: #{tpu_custom_call.1} parent=1 // pred_fallthru
      _
    // Predicated region
    $region6: #{tpu_custom_call.1} parent=1 // pred_check
      _
    $region7: #{tpu_custom_call.1} parent=1 // pred_check_branch
      %36 = sbr.rel (0) target = $region9
    $region8: #{tpu_custom_call.1} parent=1 // pred_region
      %s38 = ssub.s32 256, 256
      %39 = vsyncadd [#allocation6], %s38
      %s40 = sshll.u32 [#allocation5], 4
      %s41 = int_to_ptr.vmem [resolvable:$true] %s40
      %46 = dma.hbm_to_vmem [thread:$0]  %s1, 256, %s41, [#allocation6], 128, 128, 8
    $region9: #{tpu_custom_call.1} parent=1 // pred_fallthru
      _
    // Predicated region
    $region10: #{tpu_custom_call.1} parent=1 // pred_check
      _
    $region11: #{tpu_custom_call.1} parent=1 // pred_check_branch
      %48 = sbr.rel (0) target = $region13
    $region12: #{tpu_custom_call.1} parent=1 // pred_region
      %s50 = ssub.s32 256, 256
      %51 = vsyncadd [#allocation6], %s50
      %s52 = sshll.u32 [#allocation7], 4
      %s53 = int_to_ptr.vmem [resolvable:$true] %s52
      %58 = dma.hbm_to_vmem [thread:$0]  %s2, 256, %s53, [#allocation6], 128, 128, 8
    $region13: #{tpu_custom_call.1} parent=1 // pred_fallthru
      _
    // Predicated region
    $region14: #{tpu_custom_call.1} parent=1 // pred_check
      _
    $region15: #{tpu_custom_call.1} parent=1 // pred_check_branch
      %60 = sbr.rel (0) target = $region17
    $region16: #{tpu_custom_call.1} parent=1 // pred_region
      %s62 = ssub.s32 256, 256
      %63 = vsyncadd [#allocation9], %s62
      %s64 = sshll.u32 [#allocation8], 4
      %s65 = int_to_ptr.vmem [resolvable:$true] %s64
      %70 = dma.hbm_to_vmem [thread:$0]  %s3, 256, %s65, [#allocation9], 128, 128, 8
    $region17: #{tpu_custom_call.1} parent=1 // pred_fallthru
      _
    // Predicated region
    $region18: #{tpu_custom_call.1} parent=1 // pred_check
      _
    $region19: #{tpu_custom_call.1} parent=1 // pred_check_branch
      %72 = sbr.rel (0) target = $region21
    $region20: #{tpu_custom_call.1} parent=1 // pred_region
      %s74 = ssub.s32 512, 512
      %75 = vsyncadd [#allocation9], %s74
      %s76 = sshll.u32 [#allocation10], 4
      %s77 = int_to_ptr.vmem [resolvable:$true] %s76
      %82 = dma.hbm_to_vmem [thread:$0]  %s4, 512, %s77, [#allocation9], 128, 128, 8
    $region21: #{tpu_custom_call.1} parent=1 // pred_fallthru
      _
    // Predicated region
    $region22: #{tpu_custom_call.1} parent=1 // pred_check
      _
    $region23: #{tpu_custom_call.1} parent=1 // pred_check_branch
      %84 = sbr.rel (0) target = $region25
    $region24: #{tpu_custom_call.1} parent=1 // pred_region
      _
    $region25: #{tpu_custom_call.1} parent=1 // pred_fallthru
      _
    // Predicated region
    $region26: #{tpu_custom_call.1} parent=1 // pred_check
      _
    $region27: #{tpu_custom_call.1} parent=1 // pred_check_branch
      %86 = sbr.rel (0) target = $region29
    $region28: #{tpu_custom_call.1} parent=1 // pred_region
      %s88 = ssub.s32 512, 512
      %89 = vsyncadd [#allocation12], %s88
      %s90 = sshll.u32 [#allocation11], 4
      %s91 = int_to_ptr.vmem [resolvable:$true] %s90
      %96 = dma.hbm_to_vmem [thread:$0]  %s6, 512, %s91, [#allocation12], 128, 128, 8
    $region29: #{tpu_custom_call.1} parent=1 // pred_fallthru
      _
    // Predicated region
    $region30: #{tpu_custom_call.1} parent=1 // pred_check
      _
    $region31: #{tpu_custom_call.1} parent=1 // pred_check_branch
      %98 = sbr.rel (0) target = $region33
    $region32: #{tpu_custom_call.1} parent=1 // pred_region
      _
    $region33: #{tpu_custom_call.1} parent=1 // pred_fallthru
      _
    // Predicated region
    $region34: #{tpu_custom_call.1} parent=1 // pred_check
      _
    $region35: #{tpu_custom_call.1} parent=1 // pred_check_branch
      %100 = sbr.rel (0) target = $region37
    $region36: #{tpu_custom_call.1} parent=1 // pred_region
      %s102 = ssub.s32 512, 512
      %103 = vsyncadd [#allocation12], %s102
      %s104 = sshll.u32 [#allocation13], 4
      %s105 = int_to_ptr.vmem [resolvable:$true] %s104
      %110 = dma.hbm_to_vmem [thread:$0]  %s8, 512, %s105, [#allocation12], 128, 128, 8
    $region37: #{tpu_custom_call.1} parent=1 // pred_fallthru
      _
    // Predicated region
    $region38: #{tpu_custom_call.1} parent=1 // pred_check
      _
    $region39: #{tpu_custom_call.1} parent=1 // pred_check_branch
      %112 = sbr.rel (0) target = $region41
    $region40: #{tpu_custom_call.1} parent=1 // pred_region
      _
    $region41: #{tpu_custom_call.1} parent=1 // pred_fallthru
      _
    // Predicated region
    $region42: #{tpu_custom_call.1} parent=1 // pred_check
      _
    $region43: #{tpu_custom_call.1} parent=1 // pred_check_branch
      %114 = sbr.rel (0) target = $region45
    $region44: #{tpu_custom_call.1} parent=1 // pred_region
      %s116 = ssub.s32 512, 512
      %117 = vsyncadd [#allocation15], %s116
      %s118 = sshll.u32 [#allocation14], 4
      %s119 = int_to_ptr.vmem [resolvable:$true] %s118
      %124 = dma.hbm_to_vmem [thread:$0]  %s10, 512, %s119, [#allocation15], 128, 128, 8
    $region45: #{tpu_custom_call.1} parent=1 // pred_fallthru
      _
    // Predicated region
    $region46: #{tpu_custom_call.1} parent=1 // pred_check
      _
    $region47: #{tpu_custom_call.1} parent=1 // pred_check_branch
      %126 = sbr.rel (0) target = $region49
    $region48: #{tpu_custom_call.1} parent=1 // pred_region
      _
    $region49: #{tpu_custom_call.1} parent=1 // pred_fallthru
      _
    // Predicated region
    $region50: #{tpu_custom_call.1} parent=1 // pred_check
      _
    $region51: #{tpu_custom_call.1} parent=1 // pred_check_branch
      %128 = sbr.rel (0) target = $region53
    $region52: #{tpu_custom_call.1} parent=1 // pred_region
      %129 = dma.done [#allocation3], 256
    $region53: #{tpu_custom_call.1} parent=1 // pred_fallthru
      _
    // Predicated region
    $region54: #{tpu_custom_call.1} parent=1 // pred_check
      _
    $region55: #{tpu_custom_call.1} parent=1 // pred_check_branch
      %131 = sbr.rel (0) target = $region57
    $region56: #{tpu_custom_call.1} parent=1 // pred_region
      %132 = dma.done [#allocation6], 256
    $region57: #{tpu_custom_call.1} parent=1 // pred_fallthru
      _
    // Predicated region
    $region58: #{tpu_custom_call.1} parent=1 // pred_check
      _
    $region59: #{tpu_custom_call.1} parent=1 // pred_check_branch
      %134 = sbr.rel (0) target = $region61
    $region60: #{tpu_custom_call.1} parent=1 // pred_region
      %135 = dma.done [#allocation6], 256
    $region61: #{tpu_custom_call.1} parent=1 // pred_fallthru
      _
    // Predicated region
    $region62: #{tpu_custom_call.1} parent=1 // pred_check
      _
    $region63: #{tpu_custom_call.1} parent=1 // pred_check_branch
      %137 = sbr.rel (0) target = $region65
    $region64: #{tpu_custom_call.1} parent=1 // pred_region
      %138 = dma.done [#allocation9], 256
    $region65: #{tpu_custom_call.1} parent=1 // pred_fallthru
      _
    // Predicated region
    $region66: #{tpu_custom_call.1} parent=1 // pred_check
      _
    $region67: #{tpu_custom_call.1} parent=1 // pred_check_branch
      %140 = sbr.rel (0) target = $region69
    $region68: #{tpu_custom_call.1} parent=1 // pred_region
      %141 = dma.done [#allocation9], 512
    $region69: #{tpu_custom_call.1} parent=1 // pred_fallthru
      _
    // Predicated region
    $region70: #{tpu_custom_call.1} parent=1 // pred_check
      _
    $region71: #{tpu_custom_call.1} parent=1 // pred_check_branch
      %143 = sbr.rel (0) target = $region73
    $region72: #{tpu_custom_call.1} parent=1 // pred_region
      %144 = dma.done [#allocation12], 512
    $region73: #{tpu_custom_call.1} parent=1 // pred_fallthru
      _
    // Predicated region
    $region74: #{tpu_custom_call.1} parent=1 // pred_check
      _
    $region75: #{tpu_custom_call.1} parent=1 // pred_check_branch
      %146 = sbr.rel (0) target = $region77
    $region76: #{tpu_custom_call.1} parent=1 // pred_region
      %147 = dma.done [#allocation12], 512
    $region77: #{tpu_custom_call.1} parent=1 // pred_fallthru
      _
    // Predicated region
    $region78: #{tpu_custom_call.1} parent=1 // pred_check
      _
    $region79: #{tpu_custom_call.1} parent=1 // pred_check_branch
      %149 = sbr.rel (0) target = $region81
    $region80: #{tpu_custom_call.1} parent=1 // pred_region
      %150 = dma.done [#allocation15], 512
    $region81: #{tpu_custom_call.1} parent=1 // pred_fallthru
      _
    %v151 = vld [vmem:[#allocation2] sm:$0xff]
    %v152 = vld [vmem:[#allocation2 + $0x8] sm:$0xff]
    %v153 = vld [vmem:[#allocation5] sm:$0xff]
    %v154 = vld [vmem:[#allocation5 + $0x8] sm:$0xff]
    %v155 = vld [vmem:[#allocation7] sm:$0xff]
    %v156 = vld [vmem:[#allocation7 + $0x8] sm:$0xff]
    %v157 = vld [vmem:[#allocation8] sm:$0xff]
    %v158 = vld [vmem:[#allocation8 + $0x8] sm:$0xff]
    %v159 = vld [vmem:[#allocation10] sm:$0xff]
    %v160 = vld [vmem:[#allocation10 + $0x8] sm:$0xff]
    %v161 = vld [vmem:[#allocation10 + $0x10] sm:$0xff]
    %v162 = vld [vmem:[#allocation10 + $0x18] sm:$0xff]
    %v163 = vld [vmem:[%s5] sm:$0x1]
    %v165 = vlaneseq
    %v166 = vshrl.u32 %v165, 7
    %v167 = vsub.s32 0, %v166
    %v168 = vrot.slane %v163, %v167
    %vm170 = vcmask 261120
    %v172 = vsel %vm170, %v151, 0
    %v175 = vsel %vm170, %v152, 0
    %177 = vmatprep.subr.mxu0 0.0
    %178 = vmatpush1.msra.mxu0 0.0
    %179 = vmatprep.subr.mxu0 0.0
    %180 = vmatpush1.msra.mxu0 0.0
    %181 = vmatprep.subr.mxu0 0.0
    %182 = vmatpush1.msra.mxu0 0.0
    %183 = vmatprep.subr.mxu0 0.0
    %184 = vmatpush1.msra.mxu0 0.0
    %185 = vmatprep.subr.mxu0 0.0
    %186 = vmatpush1.msra.mxu0 0.0
    %187 = vmatprep.subr.mxu0 0.0
    %188 = vmatpush1.msra.mxu0 0.0
    %189 = vmatprep.subr.mxu0 0.0
    %190 = vmatpush1.msra.mxu0 0.0
    %191 = vmatprep.subr.mxu0 0.0
    %192 = vmatpush1.msra.mxu0 0.0
    %193 = vmatprep.subr.mxu0 0.0
    %194 = vmatpush1.msra.mxu0 0.0
    %195 = vmatprep.subr.mxu0 0.0
    %196 = vmatpush1.msra.mxu0 0.0
    %197 = vmatprep.subr.mxu0 0.0
    %198 = vmatpush1.msra.mxu0 0.0
    %199 = vmatprep.subr.mxu0 0.0
    %200 = vmatpush1.msra.mxu0 0.0
    %201 = vmatprep.subr.mxu0 0.0
    %202 = vmatpush1.msra.mxu0 %v162
    %203 = vmatprep.subr.mxu0 0.0
    %204 = vmatpush1.msra.mxu0 %v161
    %205 = vmatprep.subr.mxu0 0.0
    %206 = vmatpush1.msra.mxu0 %v160
    %207 = vmatprep.subr.mxu0 0.0
    %208 = vmatpush1.msra.mxu0 %v159
    %209 = vmatprep.subr.mxu0 0.0
    %210 = vmatpush2.msra.mxu0 0.0
    %211 = vmatprep.subr.mxu0 0.0
    %212 = vmatpush2.msra.mxu0 0.0
    %213 = vmatprep.subr.mxu0 0.0
    %214 = vmatpush2.msra.mxu0 0.0
    %215 = vmatprep.subr.mxu0 0.0
    %216 = vmatpush2.msra.mxu0 0.0
    %217 = vmatprep.subr.mxu0 0.0
    %218 = vmatpush2.msra.mxu0 0.0
    %219 = vmatprep.subr.mxu0 0.0
    %220 = vmatpush2.msra.mxu0 0.0
    %221 = vmatprep.subr.mxu0 0.0
    %222 = vmatpush2.msra.mxu0 0.0
    %223 = vmatprep.subr.mxu0 0.0
    %224 = vmatpush2.msra.mxu0 0.0
    %225 = vmatprep.subr.mxu0 0.0
    %226 = vmatpush2.msra.mxu0 0.0
    %227 = vmatprep.subr.mxu0 0.0
    %228 = vmatpush2.msra.mxu0 0.0
    %229 = vmatprep.subr.mxu0 0.0
    %230 = vmatpush2.msra.mxu0 0.0
    %231 = vmatprep.subr.mxu0 0.0
    %232 = vmatpush2.msra.mxu0 0.0
    %233 = vmatprep.subr.mxu0 0.0
    %234 = vmatpush2.msra.mxu0 0.0
    %235 = vmatprep.subr.mxu0 0.0
    %236 = vmatpush2.msra.mxu0 0.0
    %237 = vmatprep.subr.mxu0 0.0
    %238 = vmatpush2.msra.mxu0 0.0
    %239 = vmatprep.subr.mxu0 0.0
    %240 = vmatpush2.msra.mxu0 0.0
    %241 = vmatprep.mubr.f32.mxu0 0.0
    %242 = vmatmul.mubr.f32.gmra.mxu0 %v172
    %v243 = vpop.f32.mrf.mxu0
    %v244 = vadd.f32 %v168, %v243
    %v245 = vpop.f32.mrf.mxu0
    %246 = vmatprep.mubr.f32.mxu0 0.0
    %247 = vmatmul.mubr.f32.gmra.mxu0 %v175
    %v248 = vpop.f32.mrf.mxu0
    %v249 = vadd.f32 %v168, %v248
    %v250 = vpop.f32.mrf.mxu0
    %251 = vdwg.mxu0
    %v252 = vmul.f32 %v244, 0.5
    %v253 = vmul.f32 %v249, 0.5
    %v254 = vld [vmem:[#allocation11] sm:$0xff]
    %v255 = vld [vmem:[#allocation11 + $0x8] sm:$0xff]
    %v256 = vld [vmem:[#allocation11 + $0x10] sm:$0xff]
    %v257 = vld [vmem:[#allocation11 + $0x18] sm:$0xff]
    %v258 = vld [vmem:[%s7] sm:$0x1]
    %v260 = vlaneseq
    %v261 = vshrl.u32 %v260, 7
    %v262 = vsub.s32 0, %v261
    %v263 = vrot.slane %v258, %v262
    %v266 = vsel %vm170, %v153, 0
    %v269 = vsel %vm170, %v154, 0
    %271 = vmatprep.subr.mxu0 0.0
    %272 = vmatpush1.msra.mxu0 0.0
    %273 = vmatprep.subr.mxu0 0.0
    %274 = vmatpush1.msra.mxu0 0.0
    %275 = vmatprep.subr.mxu0 0.0
    %276 = vmatpush1.msra.mxu0 0.0
    %277 = vmatprep.subr.mxu0 0.0
    %278 = vmatpush1.msra.mxu0 0.0
    %279 = vmatprep.subr.mxu0 0.0
    %280 = vmatpush1.msra.mxu0 0.0
    %281 = vmatprep.subr.mxu0 0.0
    %282 = vmatpush1.msra.mxu0 0.0
    %283 = vmatprep.subr.mxu0 0.0
    %284 = vmatpush1.msra.mxu0 0.0
    %285 = vmatprep.subr.mxu0 0.0
    %286 = vmatpush1.msra.mxu0 0.0
    %287 = vmatprep.subr.mxu0 0.0
    %288 = vmatpush1.msra.mxu0 0.0
    %289 = vmatprep.subr.mxu0 0.0
    %290 = vmatpush1.msra.mxu0 0.0
    %291 = vmatprep.subr.mxu0 0.0
    %292 = vmatpush1.msra.mxu0 0.0
    %293 = vmatprep.subr.mxu0 0.0
    %294 = vmatpush1.msra.mxu0 0.0
    %295 = vmatprep.subr.mxu0 0.0
    %296 = vmatpush1.msra.mxu0 %v257
    %297 = vmatprep.subr.mxu0 0.0
    %298 = vmatpush1.msra.mxu0 %v256
    %299 = vmatprep.subr.mxu0 0.0
    %300 = vmatpush1.msra.mxu0 %v255
    %301 = vmatprep.subr.mxu0 0.0
    %302 = vmatpush1.msra.mxu0 %v254
    %303 = vmatprep.subr.mxu0 0.0
    %304 = vmatpush2.msra.mxu0 0.0
    %305 = vmatprep.subr.mxu0 0.0
    %306 = vmatpush2.msra.mxu0 0.0
    %307 = vmatprep.subr.mxu0 0.0
    %308 = vmatpush2.msra.mxu0 0.0
    %309 = vmatprep.subr.mxu0 0.0
    %310 = vmatpush2.msra.mxu0 0.0
    %311 = vmatprep.subr.mxu0 0.0
    %312 = vmatpush2.msra.mxu0 0.0
    %313 = vmatprep.subr.mxu0 0.0
    %314 = vmatpush2.msra.mxu0 0.0
    %315 = vmatprep.subr.mxu0 0.0
    %316 = vmatpush2.msra.mxu0 0.0
    %317 = vmatprep.subr.mxu0 0.0
    %318 = vmatpush2.msra.mxu0 0.0
    %319 = vmatprep.subr.mxu0 0.0
    %320 = vmatpush2.msra.mxu0 0.0
    %321 = vmatprep.subr.mxu0 0.0
    %322 = vmatpush2.msra.mxu0 0.0
    %323 = vmatprep.subr.mxu0 0.0
    %324 = vmatpush2.msra.mxu0 0.0
    %325 = vmatprep.subr.mxu0 0.0
    %326 = vmatpush2.msra.mxu0 0.0
    %327 = vmatprep.subr.mxu0 0.0
    %328 = vmatpush2.msra.mxu0 0.0
    %329 = vmatprep.subr.mxu0 0.0
    %330 = vmatpush2.msra.mxu0 0.0
    %331 = vmatprep.subr.mxu0 0.0
    %332 = vmatpush2.msra.mxu0 0.0
    %333 = vmatprep.subr.mxu0 0.0
    %334 = vmatpush2.msra.mxu0 0.0
    %335 = vmatprep.mubr.f32.mxu0 0.0
    %336 = vmatmul.mubr.f32.gmra.mxu0 %v266
    %v337 = vpop.f32.mrf.mxu0
    %v338 = vadd.f32 %v263, %v337
    %v339 = vpop.f32.mrf.mxu0
    %340 = vmatprep.mubr.f32.mxu0 0.0
    %341 = vmatmul.mubr.f32.gmra.mxu0 %v269
    %v342 = vpop.f32.mrf.mxu0
    %v343 = vadd.f32 %v263, %v342
    %v344 = vpop.f32.mrf.mxu0
    %345 = vdwg.mxu0
    %v346 = vld [vmem:[#allocation13] sm:$0xff]
    %v347 = vld [vmem:[#allocation13 + $0x8] sm:$0xff]
    %v348 = vld [vmem:[#allocation13 + $0x10] sm:$0xff]
    %v349 = vld [vmem:[#allocation13 + $0x18] sm:$0xff]
    %v350 = vld [vmem:[%s9] sm:$0x1]
    %v352 = vlaneseq
    %v353 = vshrl.u32 %v352, 7
    %v354 = vsub.s32 0, %v353
    %v355 = vrot.slane %v350, %v354
    %v358 = vsel %vm170, %v155, 0
    %v361 = vsel %vm170, %v156, 0
    %363 = vmatprep.subr.mxu0 0.0
    %364 = vmatpush1.msra.mxu0 0.0
    %365 = vmatprep.subr.mxu0 0.0
    %366 = vmatpush1.msra.mxu0 0.0
    %367 = vmatprep.subr.mxu0 0.0
    %368 = vmatpush1.msra.mxu0 0.0
    %369 = vmatprep.subr.mxu0 0.0
    %370 = vmatpush1.msra.mxu0 0.0
    %371 = vmatprep.subr.mxu0 0.0
    %372 = vmatpush1.msra.mxu0 0.0
    %373 = vmatprep.subr.mxu0 0.0
    %374 = vmatpush1.msra.mxu0 0.0
    %375 = vmatprep.subr.mxu0 0.0
    %376 = vmatpush1.msra.mxu0 0.0
    %377 = vmatprep.subr.mxu0 0.0
    %378 = vmatpush1.msra.mxu0 0.0
    %379 = vmatprep.subr.mxu0 0.0
    %380 = vmatpush1.msra.mxu0 0.0
    %381 = vmatprep.subr.mxu0 0.0
    %382 = vmatpush1.msra.mxu0 0.0
    %383 = vmatprep.subr.mxu0 0.0
    %384 = vmatpush1.msra.mxu0 0.0
    %385 = vmatprep.subr.mxu0 0.0
    %386 = vmatpush1.msra.mxu0 0.0
    %387 = vmatprep.subr.mxu0 0.0
    %388 = vmatpush1.msra.mxu0 %v349
    %389 = vmatprep.subr.mxu0 0.0
    %390 = vmatpush1.msra.mxu0 %v348
    %391 = vmatprep.subr.mxu0 0.0
    %392 = vmatpush1.msra.mxu0 %v347
    %393 = vmatprep.subr.mxu0 0.0
    %394 = vmatpush1.msra.mxu0 %v346
    %395 = vmatprep.subr.mxu0 0.0
    %396 = vmatpush2.msra.mxu0 0.0
    %397 = vmatprep.subr.mxu0 0.0
    %398 = vmatpush2.msra.mxu0 0.0
    %399 = vmatprep.subr.mxu0 0.0
    %400 = vmatpush2.msra.mxu0 0.0
    %401 = vmatprep.subr.mxu0 0.0
    %402 = vmatpush2.msra.mxu0 0.0
    %403 = vmatprep.subr.mxu0 0.0
    %404 = vmatpush2.msra.mxu0 0.0
    %405 = vmatprep.subr.mxu0 0.0
    %406 = vmatpush2.msra.mxu0 0.0
    %407 = vmatprep.subr.mxu0 0.0
    %408 = vmatpush2.msra.mxu0 0.0
    %409 = vmatprep.subr.mxu0 0.0
    %410 = vmatpush2.msra.mxu0 0.0
    %411 = vmatprep.subr.mxu0 0.0
    %412 = vmatpush2.msra.mxu0 0.0
    %413 = vmatprep.subr.mxu0 0.0
    %414 = vmatpush2.msra.mxu0 0.0
    %415 = vmatprep.subr.mxu0 0.0
    %416 = vmatpush2.msra.mxu0 0.0
    %417 = vmatprep.subr.mxu0 0.0
    %418 = vmatpush2.msra.mxu0 0.0
    %419 = vmatprep.subr.mxu0 0.0
    %420 = vmatpush2.msra.mxu0 0.0
    %421 = vmatprep.subr.mxu0 0.0
    %422 = vmatpush2.msra.mxu0 0.0
    %423 = vmatprep.subr.mxu0 0.0
    %424 = vmatpush2.msra.mxu0 0.0
    %425 = vmatprep.subr.mxu0 0.0
    %426 = vmatpush2.msra.mxu0 0.0
    %427 = vmatprep.mubr.f32.mxu0 0.0
    %428 = vmatmul.mubr.f32.gmra.mxu0 %v358
    %v429 = vpop.f32.mrf.mxu0
    %v430 = vadd.f32 %v355, %v429
    %v431 = vpop.f32.mrf.mxu0
    %432 = vmatprep.mubr.f32.mxu0 0.0
    %433 = vmatmul.mubr.f32.gmra.mxu0 %v361
    %v434 = vpop.f32.mrf.mxu0
    %v435 = vadd.f32 %v355, %v434
    %v436 = vpop.f32.mrf.mxu0
    %437 = vdwg.mxu0
    %440 = vrot.lane.b32.xlu0 %v252, 124
    %v441 = vpop.permute.xlu0 %440
    %442 = vrot.lane.b32.xlu0 %v253, 124
    %v443 = vpop.permute.xlu0 %442
    %444 = vrot.lane.b32.xlu0 %v252, 120
    %v445 = vpop.permute.xlu0 %444
    %446 = vrot.lane.b32.xlu0 %v253, 120
    %v447 = vpop.permute.xlu0 %446
    %448 = vrot.lane.b32.xlu0 %v252, 116
    %v449 = vpop.permute.xlu0 %448
    %450 = vrot.lane.b32.xlu0 %v253, 116
    %v451 = vpop.permute.xlu0 %450
    %452 = vrot.lane.b32.xlu0 %v252, 112
    %v453 = vpop.permute.xlu0 %452
    %454 = vrot.lane.b32.xlu0 %v253, 112
    %v455 = vpop.permute.xlu0 %454
    %456 = vrot.lane.b32.xlu0 %v252, 108
    %v457 = vpop.permute.xlu0 %456
    %458 = vrot.lane.b32.xlu0 %v253, 108
    %v459 = vpop.permute.xlu0 %458
    %460 = vrot.lane.b32.xlu0 %v252, 104
    %v461 = vpop.permute.xlu0 %460
    %462 = vrot.lane.b32.xlu0 %v253, 104
    %v463 = vpop.permute.xlu0 %462
    %464 = vrot.lane.b32.xlu0 %v252, 100
    %v465 = vpop.permute.xlu0 %464
    %466 = vrot.lane.b32.xlu0 %v253, 100
    %v467 = vpop.permute.xlu0 %466
    %470 = vrot.lane.b32.xlu0 %v338, 124
    %v471 = vpop.permute.xlu0 %470
    %472 = vrot.lane.b32.xlu0 %v343, 124
    %v473 = vpop.permute.xlu0 %472
    %474 = vrot.lane.b32.xlu0 %v338, 120
    %v475 = vpop.permute.xlu0 %474
    %476 = vrot.lane.b32.xlu0 %v343, 120
    %v477 = vpop.permute.xlu0 %476
    %478 = vrot.lane.b32.xlu0 %v338, 116
    %v479 = vpop.permute.xlu0 %478
    %480 = vrot.lane.b32.xlu0 %v343, 116
    %v481 = vpop.permute.xlu0 %480
    %482 = vrot.lane.b32.xlu0 %v338, 112
    %v483 = vpop.permute.xlu0 %482
    %484 = vrot.lane.b32.xlu0 %v343, 112
    %v485 = vpop.permute.xlu0 %484
    %486 = vrot.lane.b32.xlu0 %v338, 108
    %v487 = vpop.permute.xlu0 %486
    %488 = vrot.lane.b32.xlu0 %v343, 108
    %v489 = vpop.permute.xlu0 %488
    %490 = vrot.lane.b32.xlu0 %v338, 104
    %v491 = vpop.permute.xlu0 %490
    %492 = vrot.lane.b32.xlu0 %v343, 104
    %v493 = vpop.permute.xlu0 %492
    %494 = vrot.lane.b32.xlu0 %v338, 100
    %v495 = vpop.permute.xlu0 %494
    %496 = vrot.lane.b32.xlu0 %v343, 100
    %v497 = vpop.permute.xlu0 %496
    %500 = vrot.lane.b32.xlu0 %v430, 124
    %v501 = vpop.permute.xlu0 %500
    %502 = vrot.lane.b32.xlu0 %v435, 124
    %v503 = vpop.permute.xlu0 %502
    %506 = vrot.lane.b32.xlu0 %v430, 120
    %v507 = vpop.permute.xlu0 %506
    %508 = vrot.lane.b32.xlu0 %v435, 120
    %v509 = vpop.permute.xlu0 %508
    %512 = vrot.lane.b32.xlu0 %v430, 116
    %v513 = vpop.permute.xlu0 %512
    %514 = vrot.lane.b32.xlu0 %v435, 116
    %v515 = vpop.permute.xlu0 %514
    %518 = vrot.lane.b32.xlu0 %v430, 112
    %v519 = vpop.permute.xlu0 %518
    %520 = vrot.lane.b32.xlu0 %v435, 112
    %v521 = vpop.permute.xlu0 %520
    %524 = vrot.lane.b32.xlu0 %v430, 108
    %v525 = vpop.permute.xlu0 %524
    %526 = vrot.lane.b32.xlu0 %v435, 108
    %v527 = vpop.permute.xlu0 %526
    %530 = vrot.lane.b32.xlu0 %v430, 104
    %v531 = vpop.permute.xlu0 %530
    %532 = vrot.lane.b32.xlu0 %v435, 104
    %v533 = vpop.permute.xlu0 %532
    %536 = vrot.lane.b32.xlu0 %v430, 100
    %v537 = vpop.permute.xlu0 %536
    %538 = vrot.lane.b32.xlu0 %v435, 100
    %v539 = vpop.permute.xlu0 %538
    %vm542 = vcmask 31744
    %v543 = vsel %vm542, %v252, 0
    %v545 = vsel %vm542, %v253, 0
    %v547 = vsel %vm542, %v338, 0
    %v549 = vsel %vm542, %v343, 0
    %551 = vmatprep.subr.mxu0 0.0
    %552 = vmatpush1.xpose.msra.mxu0 0.0
    %553 = vmatprep.subr.mxu0 0.0
    %554 = vmatpush1.xpose.msra.mxu0 0.0
    %555 = vmatprep.subr.mxu0 0.0
    %556 = vmatpush1.xpose.msra.mxu0 0.0
    %557 = vmatprep.subr.mxu0 0.0
    %558 = vmatpush1.xpose.msra.mxu0 0.0
    %559 = vmatprep.subr.mxu0 0.0
    %560 = vmatpush1.xpose.msra.mxu0 0.0
    %561 = vmatprep.subr.mxu0 0.0
    %562 = vmatpush1.xpose.msra.mxu0 0.0
    %563 = vmatprep.subr.mxu0 0.0
    %564 = vmatpush1.xpose.msra.mxu0 0.0
    %565 = vmatprep.subr.mxu0 0.0
    %566 = vmatpush1.xpose.msra.mxu0 0.0
    %567 = vmatprep.subr.mxu0 0.0
    %568 = vmatpush1.xpose.msra.mxu0 0.0
    %569 = vmatprep.subr.mxu0 0.0
    %570 = vmatpush1.xpose.msra.mxu0 0.0
    %571 = vmatprep.subr.mxu0 0.0
    %572 = vmatpush1.xpose.msra.mxu0 0.0
    %573 = vmatprep.subr.mxu0 0.0
    %574 = vmatpush1.xpose.msra.mxu0 0.0
    %575 = vmatprep.subr.mxu0 0.0
    %576 = vmatpush1.xpose.msra.mxu0 0.0
    %577 = vmatprep.subr.mxu0 0.0
    %578 = vmatpush1.xpose.msra.mxu0 0.0
    %579 = vmatprep.subr.mxu0 0.0
    %580 = vmatpush1.xpose.msra.mxu0 %v549
    %581 = vmatprep.subr.mxu0 0.0
    %582 = vmatpush1.xpose.msra.mxu0 %v547
    %583 = vmatprep.subr.mxu0 0.0
    %584 = vmatpush2.xpose.msra.mxu0 0.0
    %585 = vmatprep.subr.mxu0 0.0
    %586 = vmatpush2.xpose.msra.mxu0 0.0
    %587 = vmatprep.subr.mxu0 0.0
    %588 = vmatpush2.xpose.msra.mxu0 0.0
    %589 = vmatprep.subr.mxu0 0.0
    %590 = vmatpush2.xpose.msra.mxu0 0.0
    %591 = vmatprep.subr.mxu0 0.0
    %592 = vmatpush2.xpose.msra.mxu0 0.0
    %593 = vmatprep.subr.mxu0 0.0
    %594 = vmatpush2.xpose.msra.mxu0 0.0
    %595 = vmatprep.subr.mxu0 0.0
    %596 = vmatpush2.xpose.msra.mxu0 0.0
    %597 = vmatprep.subr.mxu0 0.0
    %598 = vmatpush2.xpose.msra.mxu0 0.0
    %599 = vmatprep.subr.mxu0 0.0
    %600 = vmatpush2.xpose.msra.mxu0 0.0
    %601 = vmatprep.subr.mxu0 0.0
    %602 = vmatpush2.xpose.msra.mxu0 0.0
    %603 = vmatprep.subr.mxu0 0.0
    %604 = vmatpush2.xpose.msra.mxu0 0.0
    %605 = vmatprep.subr.mxu0 0.0
    %606 = vmatpush2.xpose.msra.mxu0 0.0
    %607 = vmatprep.subr.mxu0 0.0
    %608 = vmatpush2.xpose.msra.mxu0 0.0
    %609 = vmatprep.subr.mxu0 0.0
    %610 = vmatpush2.xpose.msra.mxu0 0.0
    %611 = vmatprep.subr.mxu0 0.0
    %612 = vmatpush2.xpose.msra.mxu0 0.0
    %613 = vmatprep.subr.mxu0 0.0
    %614 = vmatpush2.xpose.msra.mxu0 0.0
    %615 = vmatprep.mubr.f32.mxu0 0.0
    %616 = vmatmul.mubr.f32.gmra.mxu0 %v543
    %v617 = vpop.f32.mrf.mxu0
    %v618 = vadd.f32 %v157, %v617
    %v619 = vpop.f32.mrf.mxu0
    %620 = vmatprep.mubr.f32.mxu0 0.0
    %621 = vmatmul.mubr.f32.gmra.mxu0 %v545
    %v622 = vpop.f32.mrf.mxu0
    %v623 = vadd.f32 %v158, %v622
    %v624 = vpop.f32.mrf.mxu0
    %625 = vdwg.mxu0
    %v626 = vsel %vm542, %v441, 0
    %v628 = vsel %vm542, %v443, 0
    %v630 = vsel %vm542, %v471, 0
    %v632 = vsel %vm542, %v473, 0
    %634 = vmatprep.subr.mxu0 0.0
    %635 = vmatpush1.xpose.msra.mxu0 0.0
    %636 = vmatprep.subr.mxu0 0.0
    %637 = vmatpush1.xpose.msra.mxu0 0.0
    %638 = vmatprep.subr.mxu0 0.0
    %639 = vmatpush1.xpose.msra.mxu0 0.0
    %640 = vmatprep.subr.mxu0 0.0
    %641 = vmatpush1.xpose.msra.mxu0 0.0
    %642 = vmatprep.subr.mxu0 0.0
    %643 = vmatpush1.xpose.msra.mxu0 0.0
    %644 = vmatprep.subr.mxu0 0.0
    %645 = vmatpush1.xpose.msra.mxu0 0.0
    %646 = vmatprep.subr.mxu0 0.0
    %647 = vmatpush1.xpose.msra.mxu0 0.0
    %648 = vmatprep.subr.mxu0 0.0
    %649 = vmatpush1.xpose.msra.mxu0 0.0
    %650 = vmatprep.subr.mxu0 0.0
    %651 = vmatpush1.xpose.msra.mxu0 0.0
    %652 = vmatprep.subr.mxu0 0.0
    %653 = vmatpush1.xpose.msra.mxu0 0.0
    %654 = vmatprep.subr.mxu0 0.0
    %655 = vmatpush1.xpose.msra.mxu0 0.0
    %656 = vmatprep.subr.mxu0 0.0
    %657 = vmatpush1.xpose.msra.mxu0 0.0
    %658 = vmatprep.subr.mxu0 0.0
    %659 = vmatpush1.xpose.msra.mxu0 0.0
    %660 = vmatprep.subr.mxu0 0.0
    %661 = vmatpush1.xpose.msra.mxu0 0.0
    %662 = vmatprep.subr.mxu0 0.0
    %663 = vmatpush1.xpose.msra.mxu0 %v632
    %664 = vmatprep.subr.mxu0 0.0
    %665 = vmatpush1.xpose.msra.mxu0 %v630
    %666 = vmatprep.subr.mxu0 0.0
    %667 = vmatpush2.xpose.msra.mxu0 0.0
    %668 = vmatprep.subr.mxu0 0.0
    %669 = vmatpush2.xpose.msra.mxu0 0.0
    %670 = vmatprep.subr.mxu0 0.0
    %671 = vmatpush2.xpose.msra.mxu0 0.0
    %672 = vmatprep.subr.mxu0 0.0
    %673 = vmatpush2.xpose.msra.mxu0 0.0
    %674 = vmatprep.subr.mxu0 0.0
    %675 = vmatpush2.xpose.msra.mxu0 0.0
    %676 = vmatprep.subr.mxu0 0.0
    %677 = vmatpush2.xpose.msra.mxu0 0.0
    %678 = vmatprep.subr.mxu0 0.0
    %679 = vmatpush2.xpose.msra.mxu0 0.0
    %680 = vmatprep.subr.mxu0 0.0
    %681 = vmatpush2.xpose.msra.mxu0 0.0
    %682 = vmatprep.subr.mxu0 0.0
    %683 = vmatpush2.xpose.msra.mxu0 0.0
    %684 = vmatprep.subr.mxu0 0.0
    %685 = vmatpush2.xpose.msra.mxu0 0.0
    %686 = vmatprep.subr.mxu0 0.0
    %687 = vmatpush2.xpose.msra.mxu0 0.0
    %688 = vmatprep.subr.mxu0 0.0
    %689 = vmatpush2.xpose.msra.mxu0 0.0
    %690 = vmatprep.subr.mxu0 0.0
    %691 = vmatpush2.xpose.msra.mxu0 0.0
    %692 = vmatprep.subr.mxu0 0.0
    %693 = vmatpush2.xpose.msra.mxu0 0.0
    %694 = vmatprep.subr.mxu0 0.0
    %695 = vmatpush2.xpose.msra.mxu0 0.0
    %696 = vmatprep.subr.mxu0 0.0
    %697 = vmatpush2.xpose.msra.mxu0 0.0
    %698 = vmatprep.mubr.f32.mxu0 0.0
    %699 = vmatmul.mubr.f32.gmra.mxu0 %v626
    %v700 = vpop.f32.mrf.mxu0
    %v701 = vadd.f32 %v157, %v700
    %v702 = vpop.f32.mrf.mxu0
    %703 = vmatprep.mubr.f32.mxu0 0.0
    %704 = vmatmul.mubr.f32.gmra.mxu0 %v628
    %v705 = vpop.f32.mrf.mxu0
    %v706 = vadd.f32 %v158, %v705
    %v707 = vpop.f32.mrf.mxu0
    %708 = vdwg.mxu0
    %v709 = vsel %vm542, %v445, 0
    %v711 = vsel %vm542, %v447, 0
    %v713 = vsel %vm542, %v475, 0
    %v715 = vsel %vm542, %v477, 0
    %717 = vmatprep.subr.mxu0 0.0
    %718 = vmatpush1.xpose.msra.mxu0 0.0
    %719 = vmatprep.subr.mxu0 0.0
    %720 = vmatpush1.xpose.msra.mxu0 0.0
    %721 = vmatprep.subr.mxu0 0.0
    %722 = vmatpush1.xpose.msra.mxu0 0.0
    %723 = vmatprep.subr.mxu0 0.0
    %724 = vmatpush1.xpose.msra.mxu0 0.0
    %725 = vmatprep.subr.mxu0 0.0
    %726 = vmatpush1.xpose.msra.mxu0 0.0
    %727 = vmatprep.subr.mxu0 0.0
    %728 = vmatpush1.xpose.msra.mxu0 0.0
    %729 = vmatprep.subr.mxu0 0.0
    %730 = vmatpush1.xpose.msra.mxu0 0.0
    %731 = vmatprep.subr.mxu0 0.0
    %732 = vmatpush1.xpose.msra.mxu0 0.0
    %733 = vmatprep.subr.mxu0 0.0
    %734 = vmatpush1.xpose.msra.mxu0 0.0
    %735 = vmatprep.subr.mxu0 0.0
    %736 = vmatpush1.xpose.msra.mxu0 0.0
    %737 = vmatprep.subr.mxu0 0.0
    %738 = vmatpush1.xpose.msra.mxu0 0.0
    %739 = vmatprep.subr.mxu0 0.0
    %740 = vmatpush1.xpose.msra.mxu0 0.0
    %741 = vmatprep.subr.mxu0 0.0
    %742 = vmatpush1.xpose.msra.mxu0 0.0
    %743 = vmatprep.subr.mxu0 0.0
    %744 = vmatpush1.xpose.msra.mxu0 0.0
    %745 = vmatprep.subr.mxu0 0.0
    %746 = vmatpush1.xpose.msra.mxu0 %v715
    %747 = vmatprep.subr.mxu0 0.0
    %748 = vmatpush1.xpose.msra.mxu0 %v713
    %749 = vmatprep.subr.mxu0 0.0
    %750 = vmatpush2.xpose.msra.mxu0 0.0
    %751 = vmatprep.subr.mxu0 0.0
    %752 = vmatpush2.xpose.msra.mxu0 0.0
    %753 = vmatprep.subr.mxu0 0.0
    %754 = vmatpush2.xpose.msra.mxu0 0.0
    %755 = vmatprep.subr.mxu0 0.0
    %756 = vmatpush2.xpose.msra.mxu0 0.0
    %757 = vmatprep.subr.mxu0 0.0
    %758 = vmatpush2.xpose.msra.mxu0 0.0
    %759 = vmatprep.subr.mxu0 0.0
    %760 = vmatpush2.xpose.msra.mxu0 0.0
    %761 = vmatprep.subr.mxu0 0.0
    %762 = vmatpush2.xpose.msra.mxu0 0.0
    %763 = vmatprep.subr.mxu0 0.0
    %764 = vmatpush2.xpose.msra.mxu0 0.0
    %765 = vmatprep.subr.mxu0 0.0
    %766 = vmatpush2.xpose.msra.mxu0 0.0
    %767 = vmatprep.subr.mxu0 0.0
    %768 = vmatpush2.xpose.msra.mxu0 0.0
    %769 = vmatprep.subr.mxu0 0.0
    %770 = vmatpush2.xpose.msra.mxu0 0.0
    %771 = vmatprep.subr.mxu0 0.0
    %772 = vmatpush2.xpose.msra.mxu0 0.0
    %773 = vmatprep.subr.mxu0 0.0
    %774 = vmatpush2.xpose.msra.mxu0 0.0
    %775 = vmatprep.subr.mxu0 0.0
    %776 = vmatpush2.xpose.msra.mxu0 0.0
    %777 = vmatprep.subr.mxu0 0.0
    %778 = vmatpush2.xpose.msra.mxu0 0.0
    %779 = vmatprep.subr.mxu0 0.0
    %780 = vmatpush2.xpose.msra.mxu0 0.0
    %781 = vmatprep.mubr.f32.mxu0 0.0
    %782 = vmatmul.mubr.f32.gmra.mxu0 %v709
    %v783 = vpop.f32.mrf.mxu0
    %v784 = vadd.f32 %v157, %v783
    %v785 = vpop.f32.mrf.mxu0
    %786 = vmatprep.mubr.f32.mxu0 0.0
    %787 = vmatmul.mubr.f32.gmra.mxu0 %v711
    %v788 = vpop.f32.mrf.mxu0
    %v789 = vadd.f32 %v158, %v788
    %v790 = vpop.f32.mrf.mxu0
    %791 = vdwg.mxu0
    %v792 = vsel %vm542, %v449, 0
    %v794 = vsel %vm542, %v451, 0
    %v796 = vsel %vm542, %v479, 0
    %v798 = vsel %vm542, %v481, 0
    %800 = vmatprep.subr.mxu0 0.0
    %801 = vmatpush1.xpose.msra.mxu0 0.0
    %802 = vmatprep.subr.mxu0 0.0
    %803 = vmatpush1.xpose.msra.mxu0 0.0
    %804 = vmatprep.subr.mxu0 0.0
    %805 = vmatpush1.xpose.msra.mxu0 0.0
    %806 = vmatprep.subr.mxu0 0.0
    %807 = vmatpush1.xpose.msra.mxu0 0.0
    %808 = vmatprep.subr.mxu0 0.0
    %809 = vmatpush1.xpose.msra.mxu0 0.0
    %810 = vmatprep.subr.mxu0 0.0
    %811 = vmatpush1.xpose.msra.mxu0 0.0
    %812 = vmatprep.subr.mxu0 0.0
    %813 = vmatpush1.xpose.msra.mxu0 0.0
    %814 = vmatprep.subr.mxu0 0.0
    %815 = vmatpush1.xpose.msra.mxu0 0.0
    %816 = vmatprep.subr.mxu0 0.0
    %817 = vmatpush1.xpose.msra.mxu0 0.0
    %818 = vmatprep.subr.mxu0 0.0
    %819 = vmatpush1.xpose.msra.mxu0 0.0
    %820 = vmatprep.subr.mxu0 0.0
    %821 = vmatpush1.xpose.msra.mxu0 0.0
    %822 = vmatprep.subr.mxu0 0.0
    %823 = vmatpush1.xpose.msra.mxu0 0.0
    %824 = vmatprep.subr.mxu0 0.0
    %825 = vmatpush1.xpose.msra.mxu0 0.0
    %826 = vmatprep.subr.mxu0 0.0
    %827 = vmatpush1.xpose.msra.mxu0 0.0
    %828 = vmatprep.subr.mxu0 0.0
    %829 = vmatpush1.xpose.msra.mxu0 %v798
    %830 = vmatprep.subr.mxu0 0.0
    %831 = vmatpush1.xpose.msra.mxu0 %v796
    %832 = vmatprep.subr.mxu0 0.0
    %833 = vmatpush2.xpose.msra.mxu0 0.0
    %834 = vmatprep.subr.mxu0 0.0
    %835 = vmatpush2.xpose.msra.mxu0 0.0
    %836 = vmatprep.subr.mxu0 0.0
    %837 = vmatpush2.xpose.msra.mxu0 0.0
    %838 = vmatprep.subr.mxu0 0.0
    %839 = vmatpush2.xpose.msra.mxu0 0.0
    %840 = vmatprep.subr.mxu0 0.0
    %841 = vmatpush2.xpose.msra.mxu0 0.0
    %842 = vmatprep.subr.mxu0 0.0
    %843 = vmatpush2.xpose.msra.mxu0 0.0
    %844 = vmatprep.subr.mxu0 0.0
    %845 = vmatpush2.xpose.msra.mxu0 0.0
    %846 = vmatprep.subr.mxu0 0.0
    %847 = vmatpush2.xpose.msra.mxu0 0.0
    %848 = vmatprep.subr.mxu0 0.0
    %849 = vmatpush2.xpose.msra.mxu0 0.0
    %850 = vmatprep.subr.mxu0 0.0
    %851 = vmatpush2.xpose.msra.mxu0 0.0
    %852 = vmatprep.subr.mxu0 0.0
    %853 = vmatpush2.xpose.msra.mxu0 0.0
    %854 = vmatprep.subr.mxu0 0.0
    %855 = vmatpush2.xpose.msra.mxu0 0.0
    %856 = vmatprep.subr.mxu0 0.0
    %857 = vmatpush2.xpose.msra.mxu0 0.0
    %858 = vmatprep.subr.mxu0 0.0
    %859 = vmatpush2.xpose.msra.mxu0 0.0
    %860 = vmatprep.subr.mxu0 0.0
    %861 = vmatpush2.xpose.msra.mxu0 0.0
    %862 = vmatprep.subr.mxu0 0.0
    %863 = vmatpush2.xpose.msra.mxu0 0.0
    %864 = vmatprep.mubr.f32.mxu0 0.0
    %865 = vmatmul.mubr.f32.gmra.mxu0 %v792
    %v866 = vpop.f32.mrf.mxu0
    %v867 = vadd.f32 %v157, %v866
    %v868 = vpop.f32.mrf.mxu0
    %869 = vmatprep.mubr.f32.mxu0 0.0
    %870 = vmatmul.mubr.f32.gmra.mxu0 %v794
    %v871 = vpop.f32.mrf.mxu0
    %v872 = vadd.f32 %v158, %v871
    %v873 = vpop.f32.mrf.mxu0
    %874 = vdwg.mxu0
    %v875 = vsel %vm542, %v453, 0
    %v877 = vsel %vm542, %v455, 0
    %v879 = vsel %vm542, %v483, 0
    %v881 = vsel %vm542, %v485, 0
    %883 = vmatprep.subr.mxu0 0.0
    %884 = vmatpush1.xpose.msra.mxu0 0.0
    %885 = vmatprep.subr.mxu0 0.0
    %886 = vmatpush1.xpose.msra.mxu0 0.0
    %887 = vmatprep.subr.mxu0 0.0
    %888 = vmatpush1.xpose.msra.mxu0 0.0
    %889 = vmatprep.subr.mxu0 0.0
    %890 = vmatpush1.xpose.msra.mxu0 0.0
    %891 = vmatprep.subr.mxu0 0.0
    %892 = vmatpush1.xpose.msra.mxu0 0.0
    %893 = vmatprep.subr.mxu0 0.0
    %894 = vmatpush1.xpose.msra.mxu0 0.0
    %895 = vmatprep.subr.mxu0 0.0
    %896 = vmatpush1.xpose.msra.mxu0 0.0
    %897 = vmatprep.subr.mxu0 0.0
    %898 = vmatpush1.xpose.msra.mxu0 0.0
    %899 = vmatprep.subr.mxu0 0.0
    %900 = vmatpush1.xpose.msra.mxu0 0.0
    %901 = vmatprep.subr.mxu0 0.0
    %902 = vmatpush1.xpose.msra.mxu0 0.0
    %903 = vmatprep.subr.mxu0 0.0
    %904 = vmatpush1.xpose.msra.mxu0 0.0
    %905 = vmatprep.subr.mxu0 0.0
    %906 = vmatpush1.xpose.msra.mxu0 0.0
    %907 = vmatprep.subr.mxu0 0.0
    %908 = vmatpush1.xpose.msra.mxu0 0.0
    %909 = vmatprep.subr.mxu0 0.0
    %910 = vmatpush1.xpose.msra.mxu0 0.0
    %911 = vmatprep.subr.mxu0 0.0
    %912 = vmatpush1.xpose.msra.mxu0 %v881
    %913 = vmatprep.subr.mxu0 0.0
    %914 = vmatpush1.xpose.msra.mxu0 %v879
    %915 = vmatprep.subr.mxu0 0.0
    %916 = vmatpush2.xpose.msra.mxu0 0.0
    %917 = vmatprep.subr.mxu0 0.0
    %918 = vmatpush2.xpose.msra.mxu0 0.0
    %919 = vmatprep.subr.mxu0 0.0
    %920 = vmatpush2.xpose.msra.mxu0 0.0
    %921 = vmatprep.subr.mxu0 0.0
    %922 = vmatpush2.xpose.msra.mxu0 0.0
    %923 = vmatprep.subr.mxu0 0.0
    %924 = vmatpush2.xpose.msra.mxu0 0.0
    %925 = vmatprep.subr.mxu0 0.0
    %926 = vmatpush2.xpose.msra.mxu0 0.0
    %927 = vmatprep.subr.mxu0 0.0
    %928 = vmatpush2.xpose.msra.mxu0 0.0
    %929 = vmatprep.subr.mxu0 0.0
    %930 = vmatpush2.xpose.msra.mxu0 0.0
    %931 = vmatprep.subr.mxu0 0.0
    %932 = vmatpush2.xpose.msra.mxu0 0.0
    %933 = vmatprep.subr.mxu0 0.0
    %934 = vmatpush2.xpose.msra.mxu0 0.0
    %935 = vmatprep.subr.mxu0 0.0
    %936 = vmatpush2.xpose.msra.mxu0 0.0
    %937 = vmatprep.subr.mxu0 0.0
    %938 = vmatpush2.xpose.msra.mxu0 0.0
    %939 = vmatprep.subr.mxu0 0.0
    %940 = vmatpush2.xpose.msra.mxu0 0.0
    %941 = vmatprep.subr.mxu0 0.0
    %942 = vmatpush2.xpose.msra.mxu0 0.0
    %943 = vmatprep.subr.mxu0 0.0
    %944 = vmatpush2.xpose.msra.mxu0 0.0
    %945 = vmatprep.subr.mxu0 0.0
    %946 = vmatpush2.xpose.msra.mxu0 0.0
    %947 = vmatprep.mubr.f32.mxu0 0.0
    %948 = vmatmul.mubr.f32.gmra.mxu0 %v875
    %v949 = vpop.f32.mrf.mxu0
    %v950 = vadd.f32 %v157, %v949
    %v951 = vpop.f32.mrf.mxu0
    %952 = vmatprep.mubr.f32.mxu0 0.0
    %953 = vmatmul.mubr.f32.gmra.mxu0 %v877
    %v954 = vpop.f32.mrf.mxu0
    %v955 = vadd.f32 %v158, %v954
    %v956 = vpop.f32.mrf.mxu0
    %957 = vdwg.mxu0
    %v958 = vsel %vm542, %v457, 0
    %v960 = vsel %vm542, %v459, 0
    %v962 = vsel %vm542, %v487, 0
    %v964 = vsel %vm542, %v489, 0
    %966 = vmatprep.subr.mxu0 0.0
    %967 = vmatpush1.xpose.msra.mxu0 0.0
    %968 = vmatprep.subr.mxu0 0.0
    %969 = vmatpush1.xpose.msra.mxu0 0.0
    %970 = vmatprep.subr.mxu0 0.0
    %971 = vmatpush1.xpose.msra.mxu0 0.0
    %972 = vmatprep.subr.mxu0 0.0
    %973 = vmatpush1.xpose.msra.mxu0 0.0
    %974 = vmatprep.subr.mxu0 0.0
    %975 = vmatpush1.xpose.msra.mxu0 0.0
    %976 = vmatprep.subr.mxu0 0.0
    %977 = vmatpush1.xpose.msra.mxu0 0.0
    %978 = vmatprep.subr.mxu0 0.0
    %979 = vmatpush1.xpose.msra.mxu0 0.0
    %980 = vmatprep.subr.mxu0 0.0
    %981 = vmatpush1.xpose.msra.mxu0 0.0
    %982 = vmatprep.subr.mxu0 0.0
    %983 = vmatpush1.xpose.msra.mxu0 0.0
    %984 = vmatprep.subr.mxu0 0.0
    %985 = vmatpush1.xpose.msra.mxu0 0.0
    %986 = vmatprep.subr.mxu0 0.0
    %987 = vmatpush1.xpose.msra.mxu0 0.0
    %988 = vmatprep.subr.mxu0 0.0
    %989 = vmatpush1.xpose.msra.mxu0 0.0
    %990 = vmatprep.subr.mxu0 0.0
    %991 = vmatpush1.xpose.msra.mxu0 0.0
    %992 = vmatprep.subr.mxu0 0.0
    %993 = vmatpush1.xpose.msra.mxu0 0.0
    %994 = vmatprep.subr.mxu0 0.0
    %995 = vmatpush1.xpose.msra.mxu0 %v964
    %996 = vmatprep.subr.mxu0 0.0
    %997 = vmatpush1.xpose.msra.mxu0 %v962
    %998 = vmatprep.subr.mxu0 0.0
    %999 = vmatpush2.xpose.msra.mxu0 0.0
    %1000 = vmatprep.subr.mxu0 0.0
    %1001 = vmatpush2.xpose.msra.mxu0 0.0
    %1002 = vmatprep.subr.mxu0 0.0
    %1003 = vmatpush2.xpose.msra.mxu0 0.0
    %1004 = vmatprep.subr.mxu0 0.0
    %1005 = vmatpush2.xpose.msra.mxu0 0.0
    %1006 = vmatprep.subr.mxu0 0.0
    %1007 = vmatpush2.xpose.msra.mxu0 0.0
    %1008 = vmatprep.subr.mxu0 0.0
    %1009 = vmatpush2.xpose.msra.mxu0 0.0
    %1010 = vmatprep.subr.mxu0 0.0
    %1011 = vmatpush2.xpose.msra.mxu0 0.0
    %1012 = vmatprep.subr.mxu0 0.0
    %1013 = vmatpush2.xpose.msra.mxu0 0.0
    %1014 = vmatprep.subr.mxu0 0.0
    %1015 = vmatpush2.xpose.msra.mxu0 0.0
    %1016 = vmatprep.subr.mxu0 0.0
    %1017 = vmatpush2.xpose.msra.mxu0 0.0
    %1018 = vmatprep.subr.mxu0 0.0
    %1019 = vmatpush2.xpose.msra.mxu0 0.0
    %1020 = vmatprep.subr.mxu0 0.0
    %1021 = vmatpush2.xpose.msra.mxu0 0.0
    %1022 = vmatprep.subr.mxu0 0.0
    %1023 = vmatpush2.xpose.msra.mxu0 0.0
    %1024 = vmatprep.subr.mxu0 0.0
    %1025 = vmatpush2.xpose.msra.mxu0 0.0
    %1026 = vmatprep.subr.mxu0 0.0
    %1027 = vmatpush2.xpose.msra.mxu0 0.0
    %1028 = vmatprep.subr.mxu0 0.0
    %1029 = vmatpush2.xpose.msra.mxu0 0.0
    %1030 = vmatprep.mubr.f32.mxu0 0.0
    %1031 = vmatmul.mubr.f32.gmra.mxu0 %v958
    %v1032 = vpop.f32.mrf.mxu0
    %v1033 = vadd.f32 %v157, %v1032
    %v1034 = vpop.f32.mrf.mxu0
    %1035 = vmatprep.mubr.f32.mxu0 0.0
    %1036 = vmatmul.mubr.f32.gmra.mxu0 %v960
    %v1037 = vpop.f32.mrf.mxu0
    %v1038 = vadd.f32 %v158, %v1037
    %v1039 = vpop.f32.mrf.mxu0
    %1040 = vdwg.mxu0
    %v1041 = vsel %vm542, %v461, 0
    %v1043 = vsel %vm542, %v463, 0
    %v1045 = vsel %vm542, %v491, 0
    %v1047 = vsel %vm542, %v493, 0
    %1049 = vmatprep.subr.mxu0 0.0
    %1050 = vmatpush1.xpose.msra.mxu0 0.0
    %1051 = vmatprep.subr.mxu0 0.0
    %1052 = vmatpush1.xpose.msra.mxu0 0.0
    %1053 = vmatprep.subr.mxu0 0.0
    %1054 = vmatpush1.xpose.msra.mxu0 0.0
    %1055 = vmatprep.subr.mxu0 0.0
    %1056 = vmatpush1.xpose.msra.mxu0 0.0
    %1057 = vmatprep.subr.mxu0 0.0
    %1058 = vmatpush1.xpose.msra.mxu0 0.0
    %1059 = vmatprep.subr.mxu0 0.0
    %1060 = vmatpush1.xpose.msra.mxu0 0.0
    %1061 = vmatprep.subr.mxu0 0.0
    %1062 = vmatpush1.xpose.msra.mxu0 0.0
    %1063 = vmatprep.subr.mxu0 0.0
    %1064 = vmatpush1.xpose.msra.mxu0 0.0
    %1065 = vmatprep.subr.mxu0 0.0
    %1066 = vmatpush1.xpose.msra.mxu0 0.0
    %1067 = vmatprep.subr.mxu0 0.0
    %1068 = vmatpush1.xpose.msra.mxu0 0.0
    %1069 = vmatprep.subr.mxu0 0.0
    %1070 = vmatpush1.xpose.msra.mxu0 0.0
    %1071 = vmatprep.subr.mxu0 0.0
    %1072 = vmatpush1.xpose.msra.mxu0 0.0
    %1073 = vmatprep.subr.mxu0 0.0
    %1074 = vmatpush1.xpose.msra.mxu0 0.0
    %1075 = vmatprep.subr.mxu0 0.0
    %1076 = vmatpush1.xpose.msra.mxu0 0.0
    %1077 = vmatprep.subr.mxu0 0.0
    %1078 = vmatpush1.xpose.msra.mxu0 %v1047
    %1079 = vmatprep.subr.mxu0 0.0
    %1080 = vmatpush1.xpose.msra.mxu0 %v1045
    %1081 = vmatprep.subr.mxu0 0.0
    %1082 = vmatpush2.xpose.msra.mxu0 0.0
    %1083 = vmatprep.subr.mxu0 0.0
    %1084 = vmatpush2.xpose.msra.mxu0 0.0
    %1085 = vmatprep.subr.mxu0 0.0
    %1086 = vmatpush2.xpose.msra.mxu0 0.0
    %1087 = vmatprep.subr.mxu0 0.0
    %1088 = vmatpush2.xpose.msra.mxu0 0.0
    %1089 = vmatprep.subr.mxu0 0.0
    %1090 = vmatpush2.xpose.msra.mxu0 0.0
    %1091 = vmatprep.subr.mxu0 0.0
    %1092 = vmatpush2.xpose.msra.mxu0 0.0
    %1093 = vmatprep.subr.mxu0 0.0
    %1094 = vmatpush2.xpose.msra.mxu0 0.0
    %1095 = vmatprep.subr.mxu0 0.0
    %1096 = vmatpush2.xpose.msra.mxu0 0.0
    %1097 = vmatprep.subr.mxu0 0.0
    %1098 = vmatpush2.xpose.msra.mxu0 0.0
    %1099 = vmatprep.subr.mxu0 0.0
    %1100 = vmatpush2.xpose.msra.mxu0 0.0
    %1101 = vmatprep.subr.mxu0 0.0
    %1102 = vmatpush2.xpose.msra.mxu0 0.0
    %1103 = vmatprep.subr.mxu0 0.0
    %1104 = vmatpush2.xpose.msra.mxu0 0.0
    %1105 = vmatprep.subr.mxu0 0.0
    %1106 = vmatpush2.xpose.msra.mxu0 0.0
    %1107 = vmatprep.subr.mxu0 0.0
    %1108 = vmatpush2.xpose.msra.mxu0 0.0
    %1109 = vmatprep.subr.mxu0 0.0
    %1110 = vmatpush2.xpose.msra.mxu0 0.0
    %1111 = vmatprep.subr.mxu0 0.0
    %1112 = vmatpush2.xpose.msra.mxu0 0.0
    %1113 = vmatprep.mubr.f32.mxu0 0.0
    %1114 = vmatmul.mubr.f32.gmra.mxu0 %v1041
    %v1115 = vpop.f32.mrf.mxu0
    %v1116 = vadd.f32 %v157, %v1115
    %v1117 = vpop.f32.mrf.mxu0
    %1118 = vmatprep.mubr.f32.mxu0 0.0
    %1119 = vmatmul.mubr.f32.gmra.mxu0 %v1043
    %v1120 = vpop.f32.mrf.mxu0
    %v1121 = vadd.f32 %v158, %v1120
    %v1122 = vpop.f32.mrf.mxu0
    %1123 = vdwg.mxu0
    %v1124 = vsel %vm542, %v465, 0
    %v1126 = vsel %vm542, %v467, 0
    %v1128 = vsel %vm542, %v495, 0
    %v1130 = vsel %vm542, %v497, 0
    %1132 = vmatprep.subr.mxu0 0.0
    %1133 = vmatpush1.xpose.msra.mxu0 0.0
    %1134 = vmatprep.subr.mxu0 0.0
    %1135 = vmatpush1.xpose.msra.mxu0 0.0
    %1136 = vmatprep.subr.mxu0 0.0
    %1137 = vmatpush1.xpose.msra.mxu0 0.0
    %1138 = vmatprep.subr.mxu0 0.0
    %1139 = vmatpush1.xpose.msra.mxu0 0.0
    %1140 = vmatprep.subr.mxu0 0.0
    %1141 = vmatpush1.xpose.msra.mxu0 0.0
    %1142 = vmatprep.subr.mxu0 0.0
    %1143 = vmatpush1.xpose.msra.mxu0 0.0
    %1144 = vmatprep.subr.mxu0 0.0
    %1145 = vmatpush1.xpose.msra.mxu0 0.0
    %1146 = vmatprep.subr.mxu0 0.0
    %1147 = vmatpush1.xpose.msra.mxu0 0.0
    %1148 = vmatprep.subr.mxu0 0.0
    %1149 = vmatpush1.xpose.msra.mxu0 0.0
    %1150 = vmatprep.subr.mxu0 0.0
    %1151 = vmatpush1.xpose.msra.mxu0 0.0
    %1152 = vmatprep.subr.mxu0 0.0
    %1153 = vmatpush1.xpose.msra.mxu0 0.0
    %1154 = vmatprep.subr.mxu0 0.0
    %1155 = vmatpush1.xpose.msra.mxu0 0.0
    %1156 = vmatprep.subr.mxu0 0.0
    %1157 = vmatpush1.xpose.msra.mxu0 0.0
    %1158 = vmatprep.subr.mxu0 0.0
    %1159 = vmatpush1.xpose.msra.mxu0 0.0
    %1160 = vmatprep.subr.mxu0 0.0
    %1161 = vmatpush1.xpose.msra.mxu0 %v1130
    %1162 = vmatprep.subr.mxu0 0.0
    %1163 = vmatpush1.xpose.msra.mxu0 %v1128
    %1164 = vmatprep.subr.mxu0 0.0
    %1165 = vmatpush2.xpose.msra.mxu0 0.0
    %1166 = vmatprep.subr.mxu0 0.0
    %1167 = vmatpush2.xpose.msra.mxu0 0.0
    %1168 = vmatprep.subr.mxu0 0.0
    %1169 = vmatpush2.xpose.msra.mxu0 0.0
    %1170 = vmatprep.subr.mxu0 0.0
    %1171 = vmatpush2.xpose.msra.mxu0 0.0
    %1172 = vmatprep.subr.mxu0 0.0
    %1173 = vmatpush2.xpose.msra.mxu0 0.0
    %1174 = vmatprep.subr.mxu0 0.0
    %1175 = vmatpush2.xpose.msra.mxu0 0.0
    %1176 = vmatprep.subr.mxu0 0.0
    %1177 = vmatpush2.xpose.msra.mxu0 0.0
    %1178 = vmatprep.subr.mxu0 0.0
    %1179 = vmatpush2.xpose.msra.mxu0 0.0
    %1180 = vmatprep.subr.mxu0 0.0
    %1181 = vmatpush2.xpose.msra.mxu0 0.0
    %1182 = vmatprep.subr.mxu0 0.0
    %1183 = vmatpush2.xpose.msra.mxu0 0.0
    %1184 = vmatprep.subr.mxu0 0.0
    %1185 = vmatpush2.xpose.msra.mxu0 0.0
    %1186 = vmatprep.subr.mxu0 0.0
    %1187 = vmatpush2.xpose.msra.mxu0 0.0
    %1188 = vmatprep.subr.mxu0 0.0
    %1189 = vmatpush2.xpose.msra.mxu0 0.0
    %1190 = vmatprep.subr.mxu0 0.0
    %1191 = vmatpush2.xpose.msra.mxu0 0.0
    %1192 = vmatprep.subr.mxu0 0.0
    %1193 = vmatpush2.xpose.msra.mxu0 0.0
    %1194 = vmatprep.subr.mxu0 0.0
    %1195 = vmatpush2.xpose.msra.mxu0 0.0
    %1196 = vmatprep.mubr.f32.mxu0 0.0
    %1197 = vmatmul.mubr.f32.gmra.mxu0 %v1124
    %v1198 = vpop.f32.mrf.mxu0
    %v1199 = vadd.f32 %v157, %v1198
    %v1200 = vpop.f32.mrf.mxu0
    %1201 = vmatprep.mubr.f32.mxu0 0.0
    %1202 = vmatmul.mubr.f32.gmra.mxu0 %v1126
    %v1203 = vpop.f32.mrf.mxu0
    %v1204 = vadd.f32 %v158, %v1203
    %v1205 = vpop.f32.mrf.mxu0
    %1206 = vdwg.mxu0
    %vm1207 = vcmask 130048
    %v1208 = vsel %vm1207, %v618, -inf
    %1209 = vmax.xlane.f32.xlu0 %v1208
    %v1210 = vpop.xlane.xlu0 %1209
    %v1211 = vsel %vm1207, %v623, -inf
    %1212 = vmax.xlane.f32.xlu0 %v1211
    %v1213 = vpop.xlane.xlu0 %1212
    %v1214 = vsel %vm1207, %v701, -inf
    %1215 = vmax.xlane.f32.xlu0 %v1214
    %v1216 = vpop.xlane.xlu0 %1215
    %v1217 = vsel %vm1207, %v706, -inf
    %1218 = vmax.xlane.f32.xlu0 %v1217
    %v1219 = vpop.xlane.xlu0 %1218
    %v1220 = vsel %vm1207, %v784, -inf
    %1221 = vmax.xlane.f32.xlu0 %v1220
    %v1222 = vpop.xlane.xlu0 %1221
    %v1223 = vsel %vm1207, %v789, -inf
    %1224 = vmax.xlane.f32.xlu0 %v1223
    %v1225 = vpop.xlane.xlu0 %1224
    %v1226 = vsel %vm1207, %v867, -inf
    %1227 = vmax.xlane.f32.xlu0 %v1226
    %v1228 = vpop.xlane.xlu0 %1227
    %v1229 = vsel %vm1207, %v872, -inf
    %1230 = vmax.xlane.f32.xlu0 %v1229
    %v1231 = vpop.xlane.xlu0 %1230
    %v1232 = vsel %vm1207, %v950, -inf
    %1233 = vmax.xlane.f32.xlu0 %v1232
    %v1234 = vpop.xlane.xlu0 %1233
    %v1235 = vsel %vm1207, %v955, -inf
    %1236 = vmax.xlane.f32.xlu0 %v1235
    %v1237 = vpop.xlane.xlu0 %1236
    %v1238 = vsel %vm1207, %v1033, -inf
    %1239 = vmax.xlane.f32.xlu0 %v1238
    %v1240 = vpop.xlane.xlu0 %1239
    %v1241 = vsel %vm1207, %v1038, -inf
    %1242 = vmax.xlane.f32.xlu0 %v1241
    %v1243 = vpop.xlane.xlu0 %1242
    %v1244 = vsel %vm1207, %v1116, -inf
    %1245 = vmax.xlane.f32.xlu0 %v1244
    %v1246 = vpop.xlane.xlu0 %1245
    %v1247 = vsel %vm1207, %v1121, -inf
    %1248 = vmax.xlane.f32.xlu0 %v1247
    %v1249 = vpop.xlane.xlu0 %1248
    %v1250 = vsel %vm1207, %v1199, -inf
    %1251 = vmax.xlane.f32.xlu0 %v1250
    %v1252 = vpop.xlane.xlu0 %1251
    %v1253 = vsel %vm1207, %v1204, -inf
    %1254 = vmax.xlane.f32.xlu0 %v1253
    %v1255 = vpop.xlane.xlu0 %1254
    %v1256 = vsub.f32 %v618, %v1210
    %v1257 = vsub.f32 %v623, %v1213
    %v1258 = vsub.f32 %v701, %v1216
    %v1259 = vsub.f32 %v706, %v1219
    %v1260 = vsub.f32 %v784, %v1222
    %v1261 = vsub.f32 %v789, %v1225
    %v1262 = vsub.f32 %v867, %v1228
    %v1263 = vsub.f32 %v872, %v1231
    %v1264 = vsub.f32 %v950, %v1234
    %v1265 = vsub.f32 %v955, %v1237
    %v1266 = vsub.f32 %v1033, %v1240
    %v1267 = vsub.f32 %v1038, %v1243
    %v1268 = vsub.f32 %v1116, %v1246
    %v1269 = vsub.f32 %v1121, %v1249
    %v1270 = vsub.f32 %v1199, %v1252
    %v1271 = vsub.f32 %v1204, %v1255
    %v1272 = vmul.f32 %v1256, 1.442695
    %v1273 = vpow.pop %v1272
    %v1274 = vmul.f32 %v1257, 1.442695
    %v1275 = vpow.pop %v1274
    %v1276 = vmul.f32 %v1258, 1.442695
    %v1277 = vpow.pop %v1276
    %v1278 = vmul.f32 %v1259, 1.442695
    %v1279 = vpow.pop %v1278
    %v1280 = vmul.f32 %v1260, 1.442695
    %v1281 = vpow.pop %v1280
    %v1282 = vmul.f32 %v1261, 1.442695
    %v1283 = vpow.pop %v1282
    %v1284 = vmul.f32 %v1262, 1.442695
    %v1285 = vpow.pop %v1284
    %v1286 = vmul.f32 %v1263, 1.442695
    %v1287 = vpow.pop %v1286
    %v1288 = vmul.f32 %v1264, 1.442695
    %v1289 = vpow.pop %v1288
    %v1290 = vmul.f32 %v1265, 1.442695
    %v1291 = vpow.pop %v1290
    %v1292 = vmul.f32 %v1266, 1.442695
    %v1293 = vpow.pop %v1292
    %v1294 = vmul.f32 %v1267, 1.442695
    %v1295 = vpow.pop %v1294
    %v1296 = vmul.f32 %v1268, 1.442695
    %v1297 = vpow.pop %v1296
    %v1298 = vmul.f32 %v1269, 1.442695
    %v1299 = vpow.pop %v1298
    %v1300 = vmul.f32 %v1270, 1.442695
    %v1301 = vpow.pop %v1300
    %v1302 = vmul.f32 %v1271, 1.442695
    %v1303 = vpow.pop %v1302
    %v1304 = vsel %vm1207, %v1273, 0.0
    %1305 = vadd.xlane.f32.xlu0 %v1304
    %v1306 = vpop.xlane.xlu0 %1305
    %v1307 = vsel %vm1207, %v1275, 0.0
    %1308 = vadd.xlane.f32.xlu0 %v1307
    %v1309 = vpop.xlane.xlu0 %1308
    %v1310 = vsel %vm1207, %v1277, 0.0
    %1311 = vadd.xlane.f32.xlu0 %v1310
    %v1312 = vpop.xlane.xlu0 %1311
    %v1313 = vsel %vm1207, %v1279, 0.0
    %1314 = vadd.xlane.f32.xlu0 %v1313
    %v1315 = vpop.xlane.xlu0 %1314
    %v1316 = vsel %vm1207, %v1281, 0.0
    %1317 = vadd.xlane.f32.xlu0 %v1316
    %v1318 = vpop.xlane.xlu0 %1317
    %v1319 = vsel %vm1207, %v1283, 0.0
    %1320 = vadd.xlane.f32.xlu0 %v1319
    %v1321 = vpop.xlane.xlu0 %1320
    %v1322 = vsel %vm1207, %v1285, 0.0
    %1323 = vadd.xlane.f32.xlu0 %v1322
    %v1324 = vpop.xlane.xlu0 %1323
    %v1325 = vsel %vm1207, %v1287, 0.0
    %1326 = vadd.xlane.f32.xlu0 %v1325
    %v1327 = vpop.xlane.xlu0 %1326
    %v1328 = vsel %vm1207, %v1289, 0.0
    %1329 = vadd.xlane.f32.xlu0 %v1328
    %v1330 = vpop.xlane.xlu0 %1329
    %v1331 = vsel %vm1207, %v1291, 0.0
    %1332 = vadd.xlane.f32.xlu0 %v1331
    %v1333 = vpop.xlane.xlu0 %1332
    %v1334 = vsel %vm1207, %v1293, 0.0
    %1335 = vadd.xlane.f32.xlu0 %v1334
    %v1336 = vpop.xlane.xlu0 %1335
    %v1337 = vsel %vm1207, %v1295, 0.0
    %1338 = vadd.xlane.f32.xlu0 %v1337
    %v1339 = vpop.xlane.xlu0 %1338
    %v1340 = vsel %vm1207, %v1297, 0.0
    %1341 = vadd.xlane.f32.xlu0 %v1340
    %v1342 = vpop.xlane.xlu0 %1341
    %v1343 = vsel %vm1207, %v1299, 0.0
    %1344 = vadd.xlane.f32.xlu0 %v1343
    %v1345 = vpop.xlane.xlu0 %1344
    %v1346 = vsel %vm1207, %v1301, 0.0
    %1347 = vadd.xlane.f32.xlu0 %v1346
    %v1348 = vpop.xlane.xlu0 %1347
    %v1349 = vsel %vm1207, %v1303, 0.0
    %1350 = vadd.xlane.f32.xlu0 %v1349
    %v1351 = vpop.xlane.xlu0 %1350
    %v1353 = vsel %vm1207, %v1273, 0
    %v1356 = vsel %vm1207, %v1275, 0
    %1358 = vmatprep.subr.mxu0 0.0
    %1359 = vmatpush1.msra.mxu0 0.0
    %1360 = vmatprep.subr.mxu0 0.0
    %1361 = vmatpush1.msra.mxu0 0.0
    %1362 = vmatprep.subr.mxu0 0.0
    %1363 = vmatpush1.msra.mxu0 0.0
    %1364 = vmatprep.subr.mxu0 0.0
    %1365 = vmatpush1.msra.mxu0 0.0
    %1366 = vmatprep.subr.mxu0 0.0
    %1367 = vmatpush1.msra.mxu0 0.0
    %1368 = vmatprep.subr.mxu0 0.0
    %1369 = vmatpush1.msra.mxu0 0.0
    %1370 = vmatprep.subr.mxu0 0.0
    %1371 = vmatpush1.msra.mxu0 0.0
    %1372 = vmatprep.subr.mxu0 0.0
    %1373 = vmatpush1.msra.mxu0 0.0
    %1374 = vmatprep.subr.mxu0 0.0
    %1375 = vmatpush1.msra.mxu0 0.0
    %1376 = vmatprep.subr.mxu0 0.0
    %1377 = vmatpush1.msra.mxu0 0.0
    %1378 = vmatprep.subr.mxu0 0.0
    %1379 = vmatpush1.msra.mxu0 0.0
    %1380 = vmatprep.subr.mxu0 0.0
    %1381 = vmatpush1.msra.mxu0 0.0
    %1382 = vmatprep.subr.mxu0 0.0
    %1383 = vmatpush1.msra.mxu0 0.0
    %1384 = vmatprep.subr.mxu0 0.0
    %1385 = vmatpush1.msra.mxu0 0.0
    %1386 = vmatprep.subr.mxu0 0.0
    %1387 = vmatpush1.msra.mxu0 %v435
    %1388 = vmatprep.subr.mxu0 0.0
    %1389 = vmatpush1.msra.mxu0 %v430
    %1390 = vmatprep.subr.mxu0 0.0
    %1391 = vmatpush2.msra.mxu0 0.0
    %1392 = vmatprep.subr.mxu0 0.0
    %1393 = vmatpush2.msra.mxu0 0.0
    %1394 = vmatprep.subr.mxu0 0.0
    %1395 = vmatpush2.msra.mxu0 0.0
    %1396 = vmatprep.subr.mxu0 0.0
    %1397 = vmatpush2.msra.mxu0 0.0
    %1398 = vmatprep.subr.mxu0 0.0
    %1399 = vmatpush2.msra.mxu0 0.0
    %1400 = vmatprep.subr.mxu0 0.0
    %1401 = vmatpush2.msra.mxu0 0.0
    %1402 = vmatprep.subr.mxu0 0.0
    %1403 = vmatpush2.msra.mxu0 0.0
    %1404 = vmatprep.subr.mxu0 0.0
    %1405 = vmatpush2.msra.mxu0 0.0
    %1406 = vmatprep.subr.mxu0 0.0
    %1407 = vmatpush2.msra.mxu0 0.0
    %1408 = vmatprep.subr.mxu0 0.0
    %1409 = vmatpush2.msra.mxu0 0.0
    %1410 = vmatprep.subr.mxu0 0.0
    %1411 = vmatpush2.msra.mxu0 0.0
    %1412 = vmatprep.subr.mxu0 0.0
    %1413 = vmatpush2.msra.mxu0 0.0
    %1414 = vmatprep.subr.mxu0 0.0
    %1415 = vmatpush2.msra.mxu0 0.0
    %1416 = vmatprep.subr.mxu0 0.0
    %1417 = vmatpush2.msra.mxu0 0.0
    %1418 = vmatprep.subr.mxu0 0.0
    %1419 = vmatpush2.msra.mxu0 0.0
    %1420 = vmatprep.subr.mxu0 0.0
    %1421 = vmatpush2.msra.mxu0 0.0
    %1422 = vmatprep.mubr.f32.mxu0 0.0
    %1423 = vmatmul.mubr.f32.gmra.mxu0 %v1353
    %v1424 = vpop.f32.mrf.mxu0
    %v1425 = vadd.f32 0.0, %v1424
    %v1426 = vpop.f32.mrf.mxu0
    %1427 = vmatprep.mubr.f32.mxu0 0.0
    %1428 = vmatmul.mubr.f32.gmra.mxu0 %v1356
    %v1429 = vpop.f32.mrf.mxu0
    %v1430 = vadd.f32 0.0, %v1429
    %v1431 = vpop.f32.mrf.mxu0
    %1432 = vdwg.mxu0
    %v1434 = vsel %vm1207, %v1277, 0
    %v1437 = vsel %vm1207, %v1279, 0
    %1439 = vmatprep.subr.mxu0 0.0
    %1440 = vmatpush1.msra.mxu0 0.0
    %1441 = vmatprep.subr.mxu0 0.0
    %1442 = vmatpush1.msra.mxu0 0.0
    %1443 = vmatprep.subr.mxu0 0.0
    %1444 = vmatpush1.msra.mxu0 0.0
    %1445 = vmatprep.subr.mxu0 0.0
    %1446 = vmatpush1.msra.mxu0 0.0
    %1447 = vmatprep.subr.mxu0 0.0
    %1448 = vmatpush1.msra.mxu0 0.0
    %1449 = vmatprep.subr.mxu0 0.0
    %1450 = vmatpush1.msra.mxu0 0.0
    %1451 = vmatprep.subr.mxu0 0.0
    %1452 = vmatpush1.msra.mxu0 0.0
    %1453 = vmatprep.subr.mxu0 0.0
    %1454 = vmatpush1.msra.mxu0 0.0
    %1455 = vmatprep.subr.mxu0 0.0
    %1456 = vmatpush1.msra.mxu0 0.0
    %1457 = vmatprep.subr.mxu0 0.0
    %1458 = vmatpush1.msra.mxu0 0.0
    %1459 = vmatprep.subr.mxu0 0.0
    %1460 = vmatpush1.msra.mxu0 0.0
    %1461 = vmatprep.subr.mxu0 0.0
    %1462 = vmatpush1.msra.mxu0 0.0
    %1463 = vmatprep.subr.mxu0 0.0
    %1464 = vmatpush1.msra.mxu0 0.0
    %1465 = vmatprep.subr.mxu0 0.0
    %1466 = vmatpush1.msra.mxu0 0.0
    %1467 = vmatprep.subr.mxu0 0.0
    %1468 = vmatpush1.msra.mxu0 %v503
    %1469 = vmatprep.subr.mxu0 0.0
    %1470 = vmatpush1.msra.mxu0 %v501
    %1471 = vmatprep.subr.mxu0 0.0
    %1472 = vmatpush2.msra.mxu0 0.0
    %1473 = vmatprep.subr.mxu0 0.0
    %1474 = vmatpush2.msra.mxu0 0.0
    %1475 = vmatprep.subr.mxu0 0.0
    %1476 = vmatpush2.msra.mxu0 0.0
    %1477 = vmatprep.subr.mxu0 0.0
    %1478 = vmatpush2.msra.mxu0 0.0
    %1479 = vmatprep.subr.mxu0 0.0
    %1480 = vmatpush2.msra.mxu0 0.0
    %1481 = vmatprep.subr.mxu0 0.0
    %1482 = vmatpush2.msra.mxu0 0.0
    %1483 = vmatprep.subr.mxu0 0.0
    %1484 = vmatpush2.msra.mxu0 0.0
    %1485 = vmatprep.subr.mxu0 0.0
    %1486 = vmatpush2.msra.mxu0 0.0
    %1487 = vmatprep.subr.mxu0 0.0
    %1488 = vmatpush2.msra.mxu0 0.0
    %1489 = vmatprep.subr.mxu0 0.0
    %1490 = vmatpush2.msra.mxu0 0.0
    %1491 = vmatprep.subr.mxu0 0.0
    %1492 = vmatpush2.msra.mxu0 0.0
    %1493 = vmatprep.subr.mxu0 0.0
    %1494 = vmatpush2.msra.mxu0 0.0
    %1495 = vmatprep.subr.mxu0 0.0
    %1496 = vmatpush2.msra.mxu0 0.0
    %1497 = vmatprep.subr.mxu0 0.0
    %1498 = vmatpush2.msra.mxu0 0.0
    %1499 = vmatprep.subr.mxu0 0.0
    %1500 = vmatpush2.msra.mxu0 0.0
    %1501 = vmatprep.subr.mxu0 0.0
    %1502 = vmatpush2.msra.mxu0 0.0
    %1503 = vmatprep.mubr.f32.mxu0 0.0
    %1504 = vmatmul.mubr.f32.gmra.mxu0 %v1434
    %v1505 = vpop.f32.mrf.mxu0
    %v1506 = vadd.f32 0.0, %v1505
    %v1507 = vpop.f32.mrf.mxu0
    %1508 = vmatprep.mubr.f32.mxu0 0.0
    %1509 = vmatmul.mubr.f32.gmra.mxu0 %v1437
    %v1510 = vpop.f32.mrf.mxu0
    %v1511 = vadd.f32 0.0, %v1510
    %v1512 = vpop.f32.mrf.mxu0
    %1513 = vdwg.mxu0
    %v1515 = vsel %vm1207, %v1281, 0
    %v1518 = vsel %vm1207, %v1283, 0
    %1520 = vmatprep.subr.mxu0 0.0
    %1521 = vmatpush1.msra.mxu0 0.0
    %1522 = vmatprep.subr.mxu0 0.0
    %1523 = vmatpush1.msra.mxu0 0.0
    %1524 = vmatprep.subr.mxu0 0.0
    %1525 = vmatpush1.msra.mxu0 0.0
    %1526 = vmatprep.subr.mxu0 0.0
    %1527 = vmatpush1.msra.mxu0 0.0
    %1528 = vmatprep.subr.mxu0 0.0
    %1529 = vmatpush1.msra.mxu0 0.0
    %1530 = vmatprep.subr.mxu0 0.0
    %1531 = vmatpush1.msra.mxu0 0.0
    %1532 = vmatprep.subr.mxu0 0.0
    %1533 = vmatpush1.msra.mxu0 0.0
    %1534 = vmatprep.subr.mxu0 0.0
    %1535 = vmatpush1.msra.mxu0 0.0
    %1536 = vmatprep.subr.mxu0 0.0
    %1537 = vmatpush1.msra.mxu0 0.0
    %1538 = vmatprep.subr.mxu0 0.0
    %1539 = vmatpush1.msra.mxu0 0.0
    %1540 = vmatprep.subr.mxu0 0.0
    %1541 = vmatpush1.msra.mxu0 0.0
    %1542 = vmatprep.subr.mxu0 0.0
    %1543 = vmatpush1.msra.mxu0 0.0
    %1544 = vmatprep.subr.mxu0 0.0
    %1545 = vmatpush1.msra.mxu0 0.0
    %1546 = vmatprep.subr.mxu0 0.0
    %1547 = vmatpush1.msra.mxu0 0.0
    %1548 = vmatprep.subr.mxu0 0.0
    %1549 = vmatpush1.msra.mxu0 %v509
    %1550 = vmatprep.subr.mxu0 0.0
    %1551 = vmatpush1.msra.mxu0 %v507
    %1552 = vmatprep.subr.mxu0 0.0
    %1553 = vmatpush2.msra.mxu0 0.0
    %1554 = vmatprep.subr.mxu0 0.0
    %1555 = vmatpush2.msra.mxu0 0.0
    %1556 = vmatprep.subr.mxu0 0.0
    %1557 = vmatpush2.msra.mxu0 0.0
    %1558 = vmatprep.subr.mxu0 0.0
    %1559 = vmatpush2.msra.mxu0 0.0
    %1560 = vmatprep.subr.mxu0 0.0
    %1561 = vmatpush2.msra.mxu0 0.0
    %1562 = vmatprep.subr.mxu0 0.0
    %1563 = vmatpush2.msra.mxu0 0.0
    %1564 = vmatprep.subr.mxu0 0.0
    %1565 = vmatpush2.msra.mxu0 0.0
    %1566 = vmatprep.subr.mxu0 0.0
    %1567 = vmatpush2.msra.mxu0 0.0
    %1568 = vmatprep.subr.mxu0 0.0
    %1569 = vmatpush2.msra.mxu0 0.0
    %1570 = vmatprep.subr.mxu0 0.0
    %1571 = vmatpush2.msra.mxu0 0.0
    %1572 = vmatprep.subr.mxu0 0.0
    %1573 = vmatpush2.msra.mxu0 0.0
    %1574 = vmatprep.subr.mxu0 0.0
    %1575 = vmatpush2.msra.mxu0 0.0
    %1576 = vmatprep.subr.mxu0 0.0
    %1577 = vmatpush2.msra.mxu0 0.0
    %1578 = vmatprep.subr.mxu0 0.0
    %1579 = vmatpush2.msra.mxu0 0.0
    %1580 = vmatprep.subr.mxu0 0.0
    %1581 = vmatpush2.msra.mxu0 0.0
    %1582 = vmatprep.subr.mxu0 0.0
    %1583 = vmatpush2.msra.mxu0 0.0
    %1584 = vmatprep.mubr.f32.mxu0 0.0
    %1585 = vmatmul.mubr.f32.gmra.mxu0 %v1515
    %v1586 = vpop.f32.mrf.mxu0
    %v1587 = vadd.f32 0.0, %v1586
    %v1588 = vpop.f32.mrf.mxu0
    %1589 = vmatprep.mubr.f32.mxu0 0.0
    %1590 = vmatmul.mubr.f32.gmra.mxu0 %v1518
    %v1591 = vpop.f32.mrf.mxu0
    %v1592 = vadd.f32 0.0, %v1591
    %v1593 = vpop.f32.mrf.mxu0
    %1594 = vdwg.mxu0
    %v1596 = vsel %vm1207, %v1285, 0
    %v1599 = vsel %vm1207, %v1287, 0
    %1601 = vmatprep.subr.mxu0 0.0
    %1602 = vmatpush1.msra.mxu0 0.0
    %1603 = vmatprep.subr.mxu0 0.0
    %1604 = vmatpush1.msra.mxu0 0.0
    %1605 = vmatprep.subr.mxu0 0.0
    %1606 = vmatpush1.msra.mxu0 0.0
    %1607 = vmatprep.subr.mxu0 0.0
    %1608 = vmatpush1.msra.mxu0 0.0
    %1609 = vmatprep.subr.mxu0 0.0
    %1610 = vmatpush1.msra.mxu0 0.0
    %1611 = vmatprep.subr.mxu0 0.0
    %1612 = vmatpush1.msra.mxu0 0.0
    %1613 = vmatprep.subr.mxu0 0.0
    %1614 = vmatpush1.msra.mxu0 0.0
    %1615 = vmatprep.subr.mxu0 0.0
    %1616 = vmatpush1.msra.mxu0 0.0
    %1617 = vmatprep.subr.mxu0 0.0
    %1618 = vmatpush1.msra.mxu0 0.0
    %1619 = vmatprep.subr.mxu0 0.0
    %1620 = vmatpush1.msra.mxu0 0.0
    %1621 = vmatprep.subr.mxu0 0.0
    %1622 = vmatpush1.msra.mxu0 0.0
    %1623 = vmatprep.subr.mxu0 0.0
    %1624 = vmatpush1.msra.mxu0 0.0
    %1625 = vmatprep.subr.mxu0 0.0
    %1626 = vmatpush1.msra.mxu0 0.0
    %1627 = vmatprep.subr.mxu0 0.0
    %1628 = vmatpush1.msra.mxu0 0.0
    %1629 = vmatprep.subr.mxu0 0.0
    %1630 = vmatpush1.msra.mxu0 %v515
    %1631 = vmatprep.subr.mxu0 0.0
    %1632 = vmatpush1.msra.mxu0 %v513
    %1633 = vmatprep.subr.mxu0 0.0
    %1634 = vmatpush2.msra.mxu0 0.0
    %1635 = vmatprep.subr.mxu0 0.0
    %1636 = vmatpush2.msra.mxu0 0.0
    %1637 = vmatprep.subr.mxu0 0.0
    %1638 = vmatpush2.msra.mxu0 0.0
    %1639 = vmatprep.subr.mxu0 0.0
    %1640 = vmatpush2.msra.mxu0 0.0
    %1641 = vmatprep.subr.mxu0 0.0
    %1642 = vmatpush2.msra.mxu0 0.0
    %1643 = vmatprep.subr.mxu0 0.0
    %1644 = vmatpush2.msra.mxu0 0.0
    %1645 = vmatprep.subr.mxu0 0.0
    %1646 = vmatpush2.msra.mxu0 0.0
    %1647 = vmatprep.subr.mxu0 0.0
    %1648 = vmatpush2.msra.mxu0 0.0
    %1649 = vmatprep.subr.mxu0 0.0
    %1650 = vmatpush2.msra.mxu0 0.0
    %1651 = vmatprep.subr.mxu0 0.0
    %1652 = vmatpush2.msra.mxu0 0.0
    %1653 = vmatprep.subr.mxu0 0.0
    %1654 = vmatpush2.msra.mxu0 0.0
    %1655 = vmatprep.subr.mxu0 0.0
    %1656 = vmatpush2.msra.mxu0 0.0
    %1657 = vmatprep.subr.mxu0 0.0
    %1658 = vmatpush2.msra.mxu0 0.0
    %1659 = vmatprep.subr.mxu0 0.0
    %1660 = vmatpush2.msra.mxu0 0.0
    %1661 = vmatprep.subr.mxu0 0.0
    %1662 = vmatpush2.msra.mxu0 0.0
    %1663 = vmatprep.subr.mxu0 0.0
    %1664 = vmatpush2.msra.mxu0 0.0
    %1665 = vmatprep.mubr.f32.mxu0 0.0
    %1666 = vmatmul.mubr.f32.gmra.mxu0 %v1596
    %v1667 = vpop.f32.mrf.mxu0
    %v1668 = vadd.f32 0.0, %v1667
    %v1669 = vpop.f32.mrf.mxu0
    %1670 = vmatprep.mubr.f32.mxu0 0.0
    %1671 = vmatmul.mubr.f32.gmra.mxu0 %v1599
    %v1672 = vpop.f32.mrf.mxu0
    %v1673 = vadd.f32 0.0, %v1672
    %v1674 = vpop.f32.mrf.mxu0
    %1675 = vdwg.mxu0
    %v1677 = vsel %vm1207, %v1289, 0
    %v1680 = vsel %vm1207, %v1291, 0
    %1682 = vmatprep.subr.mxu0 0.0
    %1683 = vmatpush1.msra.mxu0 0.0
    %1684 = vmatprep.subr.mxu0 0.0
    %1685 = vmatpush1.msra.mxu0 0.0
    %1686 = vmatprep.subr.mxu0 0.0
    %1687 = vmatpush1.msra.mxu0 0.0
    %1688 = vmatprep.subr.mxu0 0.0
    %1689 = vmatpush1.msra.mxu0 0.0
    %1690 = vmatprep.subr.mxu0 0.0
    %1691 = vmatpush1.msra.mxu0 0.0
    %1692 = vmatprep.subr.mxu0 0.0
    %1693 = vmatpush1.msra.mxu0 0.0
    %1694 = vmatprep.subr.mxu0 0.0
    %1695 = vmatpush1.msra.mxu0 0.0
    %1696 = vmatprep.subr.mxu0 0.0
    %1697 = vmatpush1.msra.mxu0 0.0
    %1698 = vmatprep.subr.mxu0 0.0
    %1699 = vmatpush1.msra.mxu0 0.0
    %1700 = vmatprep.subr.mxu0 0.0
    %1701 = vmatpush1.msra.mxu0 0.0
    %1702 = vmatprep.subr.mxu0 0.0
    %1703 = vmatpush1.msra.mxu0 0.0
    %1704 = vmatprep.subr.mxu0 0.0
    %1705 = vmatpush1.msra.mxu0 0.0
    %1706 = vmatprep.subr.mxu0 0.0
    %1707 = vmatpush1.msra.mxu0 0.0
    %1708 = vmatprep.subr.mxu0 0.0
    %1709 = vmatpush1.msra.mxu0 0.0
    %1710 = vmatprep.subr.mxu0 0.0
    %1711 = vmatpush1.msra.mxu0 %v521
    %1712 = vmatprep.subr.mxu0 0.0
    %1713 = vmatpush1.msra.mxu0 %v519
    %1714 = vmatprep.subr.mxu0 0.0
    %1715 = vmatpush2.msra.mxu0 0.0
    %1716 = vmatprep.subr.mxu0 0.0
    %1717 = vmatpush2.msra.mxu0 0.0
    %1718 = vmatprep.subr.mxu0 0.0
    %1719 = vmatpush2.msra.mxu0 0.0
    %1720 = vmatprep.subr.mxu0 0.0
    %1721 = vmatpush2.msra.mxu0 0.0
    %1722 = vmatprep.subr.mxu0 0.0
    %1723 = vmatpush2.msra.mxu0 0.0
    %1724 = vmatprep.subr.mxu0 0.0
    %1725 = vmatpush2.msra.mxu0 0.0
    %1726 = vmatprep.subr.mxu0 0.0
    %1727 = vmatpush2.msra.mxu0 0.0
    %1728 = vmatprep.subr.mxu0 0.0
    %1729 = vmatpush2.msra.mxu0 0.0
    %1730 = vmatprep.subr.mxu0 0.0
    %1731 = vmatpush2.msra.mxu0 0.0
    %1732 = vmatprep.subr.mxu0 0.0
    %1733 = vmatpush2.msra.mxu0 0.0
    %1734 = vmatprep.subr.mxu0 0.0
    %1735 = vmatpush2.msra.mxu0 0.0
    %1736 = vmatprep.subr.mxu0 0.0
    %1737 = vmatpush2.msra.mxu0 0.0
    %1738 = vmatprep.subr.mxu0 0.0
    %1739 = vmatpush2.msra.mxu0 0.0
    %1740 = vmatprep.subr.mxu0 0.0
    %1741 = vmatpush2.msra.mxu0 0.0
    %1742 = vmatprep.subr.mxu0 0.0
    %1743 = vmatpush2.msra.mxu0 0.0
    %1744 = vmatprep.subr.mxu0 0.0
    %1745 = vmatpush2.msra.mxu0 0.0
    %1746 = vmatprep.mubr.f32.mxu0 0.0
    %1747 = vmatmul.mubr.f32.gmra.mxu0 %v1677
    %v1748 = vpop.f32.mrf.mxu0
    %v1749 = vadd.f32 0.0, %v1748
    %v1750 = vpop.f32.mrf.mxu0
    %1751 = vmatprep.mubr.f32.mxu0 0.0
    %1752 = vmatmul.mubr.f32.gmra.mxu0 %v1680
    %v1753 = vpop.f32.mrf.mxu0
    %v1754 = vadd.f32 0.0, %v1753
    %v1755 = vpop.f32.mrf.mxu0
    %1756 = vdwg.mxu0
    %v1758 = vsel %vm1207, %v1293, 0
    %v1761 = vsel %vm1207, %v1295, 0
    %1763 = vmatprep.subr.mxu0 0.0
    %1764 = vmatpush1.msra.mxu0 0.0
    %1765 = vmatprep.subr.mxu0 0.0
    %1766 = vmatpush1.msra.mxu0 0.0
    %1767 = vmatprep.subr.mxu0 0.0
    %1768 = vmatpush1.msra.mxu0 0.0
    %1769 = vmatprep.subr.mxu0 0.0
    %1770 = vmatpush1.msra.mxu0 0.0
    %1771 = vmatprep.subr.mxu0 0.0
    %1772 = vmatpush1.msra.mxu0 0.0
    %1773 = vmatprep.subr.mxu0 0.0
    %1774 = vmatpush1.msra.mxu0 0.0
    %1775 = vmatprep.subr.mxu0 0.0
    %1776 = vmatpush1.msra.mxu0 0.0
    %1777 = vmatprep.subr.mxu0 0.0
    %1778 = vmatpush1.msra.mxu0 0.0
    %1779 = vmatprep.subr.mxu0 0.0
    %1780 = vmatpush1.msra.mxu0 0.0
    %1781 = vmatprep.subr.mxu0 0.0
    %1782 = vmatpush1.msra.mxu0 0.0
    %1783 = vmatprep.subr.mxu0 0.0
    %1784 = vmatpush1.msra.mxu0 0.0
    %1785 = vmatprep.subr.mxu0 0.0
    %1786 = vmatpush1.msra.mxu0 0.0
    %1787 = vmatprep.subr.mxu0 0.0
    %1788 = vmatpush1.msra.mxu0 0.0
    %1789 = vmatprep.subr.mxu0 0.0
    %1790 = vmatpush1.msra.mxu0 0.0
    %1791 = vmatprep.subr.mxu0 0.0
    %1792 = vmatpush1.msra.mxu0 %v527
    %1793 = vmatprep.subr.mxu0 0.0
    %1794 = vmatpush1.msra.mxu0 %v525
    %1795 = vmatprep.subr.mxu0 0.0
    %1796 = vmatpush2.msra.mxu0 0.0
    %1797 = vmatprep.subr.mxu0 0.0
    %1798 = vmatpush2.msra.mxu0 0.0
    %1799 = vmatprep.subr.mxu0 0.0
    %1800 = vmatpush2.msra.mxu0 0.0
    %1801 = vmatprep.subr.mxu0 0.0
    %1802 = vmatpush2.msra.mxu0 0.0
    %1803 = vmatprep.subr.mxu0 0.0
    %1804 = vmatpush2.msra.mxu0 0.0
    %1805 = vmatprep.subr.mxu0 0.0
    %1806 = vmatpush2.msra.mxu0 0.0
    %1807 = vmatprep.subr.mxu0 0.0
    %1808 = vmatpush2.msra.mxu0 0.0
    %1809 = vmatprep.subr.mxu0 0.0
    %1810 = vmatpush2.msra.mxu0 0.0
    %1811 = vmatprep.subr.mxu0 0.0
    %1812 = vmatpush2.msra.mxu0 0.0
    %1813 = vmatprep.subr.mxu0 0.0
    %1814 = vmatpush2.msra.mxu0 0.0
    %1815 = vmatprep.subr.mxu0 0.0
    %1816 = vmatpush2.msra.mxu0 0.0
    %1817 = vmatprep.subr.mxu0 0.0
    %1818 = vmatpush2.msra.mxu0 0.0
    %1819 = vmatprep.subr.mxu0 0.0
    %1820 = vmatpush2.msra.mxu0 0.0
    %1821 = vmatprep.subr.mxu0 0.0
    %1822 = vmatpush2.msra.mxu0 0.0
    %1823 = vmatprep.subr.mxu0 0.0
    %1824 = vmatpush2.msra.mxu0 0.0
    %1825 = vmatprep.subr.mxu0 0.0
    %1826 = vmatpush2.msra.mxu0 0.0
    %1827 = vmatprep.mubr.f32.mxu0 0.0
    %1828 = vmatmul.mubr.f32.gmra.mxu0 %v1758
    %v1829 = vpop.f32.mrf.mxu0
    %v1830 = vadd.f32 0.0, %v1829
    %v1831 = vpop.f32.mrf.mxu0
    %1832 = vmatprep.mubr.f32.mxu0 0.0
    %1833 = vmatmul.mubr.f32.gmra.mxu0 %v1761
    %v1834 = vpop.f32.mrf.mxu0
    %v1835 = vadd.f32 0.0, %v1834
    %v1836 = vpop.f32.mrf.mxu0
    %1837 = vdwg.mxu0
    %v1839 = vsel %vm1207, %v1297, 0
    %v1842 = vsel %vm1207, %v1299, 0
    %1844 = vmatprep.subr.mxu0 0.0
    %1845 = vmatpush1.msra.mxu0 0.0
    %1846 = vmatprep.subr.mxu0 0.0
    %1847 = vmatpush1.msra.mxu0 0.0
    %1848 = vmatprep.subr.mxu0 0.0
    %1849 = vmatpush1.msra.mxu0 0.0
    %1850 = vmatprep.subr.mxu0 0.0
    %1851 = vmatpush1.msra.mxu0 0.0
    %1852 = vmatprep.subr.mxu0 0.0
    %1853 = vmatpush1.msra.mxu0 0.0
    %1854 = vmatprep.subr.mxu0 0.0
    %1855 = vmatpush1.msra.mxu0 0.0
    %1856 = vmatprep.subr.mxu0 0.0
    %1857 = vmatpush1.msra.mxu0 0.0
    %1858 = vmatprep.subr.mxu0 0.0
    %1859 = vmatpush1.msra.mxu0 0.0
    %1860 = vmatprep.subr.mxu0 0.0
    %1861 = vmatpush1.msra.mxu0 0.0
    %1862 = vmatprep.subr.mxu0 0.0
    %1863 = vmatpush1.msra.mxu0 0.0
    %1864 = vmatprep.subr.mxu0 0.0
    %1865 = vmatpush1.msra.mxu0 0.0
    %1866 = vmatprep.subr.mxu0 0.0
    %1867 = vmatpush1.msra.mxu0 0.0
    %1868 = vmatprep.subr.mxu0 0.0
    %1869 = vmatpush1.msra.mxu0 0.0
    %1870 = vmatprep.subr.mxu0 0.0
    %1871 = vmatpush1.msra.mxu0 0.0
    %1872 = vmatprep.subr.mxu0 0.0
    %1873 = vmatpush1.msra.mxu0 %v533
    %1874 = vmatprep.subr.mxu0 0.0
    %1875 = vmatpush1.msra.mxu0 %v531
    %1876 = vmatprep.subr.mxu0 0.0
    %1877 = vmatpush2.msra.mxu0 0.0
    %1878 = vmatprep.subr.mxu0 0.0
    %1879 = vmatpush2.msra.mxu0 0.0
    %1880 = vmatprep.subr.mxu0 0.0
    %1881 = vmatpush2.msra.mxu0 0.0
    %1882 = vmatprep.subr.mxu0 0.0
    %1883 = vmatpush2.msra.mxu0 0.0
    %1884 = vmatprep.subr.mxu0 0.0
    %1885 = vmatpush2.msra.mxu0 0.0
    %1886 = vmatprep.subr.mxu0 0.0
    %1887 = vmatpush2.msra.mxu0 0.0
    %1888 = vmatprep.subr.mxu0 0.0
    %1889 = vmatpush2.msra.mxu0 0.0
    %1890 = vmatprep.subr.mxu0 0.0
    %1891 = vmatpush2.msra.mxu0 0.0
    %1892 = vmatprep.subr.mxu0 0.0
    %1893 = vmatpush2.msra.mxu0 0.0
    %1894 = vmatprep.subr.mxu0 0.0
    %1895 = vmatpush2.msra.mxu0 0.0
    %1896 = vmatprep.subr.mxu0 0.0
    %1897 = vmatpush2.msra.mxu0 0.0
    %1898 = vmatprep.subr.mxu0 0.0
    %1899 = vmatpush2.msra.mxu0 0.0
    %1900 = vmatprep.subr.mxu0 0.0
    %1901 = vmatpush2.msra.mxu0 0.0
    %1902 = vmatprep.subr.mxu0 0.0
    %1903 = vmatpush2.msra.mxu0 0.0
    %1904 = vmatprep.subr.mxu0 0.0
    %1905 = vmatpush2.msra.mxu0 0.0
    %1906 = vmatprep.subr.mxu0 0.0
    %1907 = vmatpush2.msra.mxu0 0.0
    %1908 = vmatprep.mubr.f32.mxu0 0.0
    %1909 = vmatmul.mubr.f32.gmra.mxu0 %v1839
    %v1910 = vpop.f32.mrf.mxu0
    %v1911 = vadd.f32 0.0, %v1910
    %v1912 = vpop.f32.mrf.mxu0
    %1913 = vmatprep.mubr.f32.mxu0 0.0
    %1914 = vmatmul.mubr.f32.gmra.mxu0 %v1842
    %v1915 = vpop.f32.mrf.mxu0
    %v1916 = vadd.f32 0.0, %v1915
    %v1917 = vpop.f32.mrf.mxu0
    %1918 = vdwg.mxu0
    %v1920 = vsel %vm1207, %v1301, 0
    %v1923 = vsel %vm1207, %v1303, 0
    %1925 = vmatprep.subr.mxu0 0.0
    %1926 = vmatpush1.msra.mxu0 0.0
    %1927 = vmatprep.subr.mxu0 0.0
    %1928 = vmatpush1.msra.mxu0 0.0
    %1929 = vmatprep.subr.mxu0 0.0
    %1930 = vmatpush1.msra.mxu0 0.0
    %1931 = vmatprep.subr.mxu0 0.0
    %1932 = vmatpush1.msra.mxu0 0.0
    %1933 = vmatprep.subr.mxu0 0.0
    %1934 = vmatpush1.msra.mxu0 0.0
    %1935 = vmatprep.subr.mxu0 0.0
    %1936 = vmatpush1.msra.mxu0 0.0
    %1937 = vmatprep.subr.mxu0 0.0
    %1938 = vmatpush1.msra.mxu0 0.0
    %1939 = vmatprep.subr.mxu0 0.0
    %1940 = vmatpush1.msra.mxu0 0.0
    %1941 = vmatprep.subr.mxu0 0.0
    %1942 = vmatpush1.msra.mxu0 0.0
    %1943 = vmatprep.subr.mxu0 0.0
    %1944 = vmatpush1.msra.mxu0 0.0
    %1945 = vmatprep.subr.mxu0 0.0
    %1946 = vmatpush1.msra.mxu0 0.0
    %1947 = vmatprep.subr.mxu0 0.0
    %1948 = vmatpush1.msra.mxu0 0.0
    %1949 = vmatprep.subr.mxu0 0.0
    %1950 = vmatpush1.msra.mxu0 0.0
    %1951 = vmatprep.subr.mxu0 0.0
    %1952 = vmatpush1.msra.mxu0 0.0
    %1953 = vmatprep.subr.mxu0 0.0
    %1954 = vmatpush1.msra.mxu0 %v539
    %1955 = vmatprep.subr.mxu0 0.0
    %1956 = vmatpush1.msra.mxu0 %v537
    %1957 = vmatprep.subr.mxu0 0.0
    %1958 = vmatpush2.msra.mxu0 0.0
    %1959 = vmatprep.subr.mxu0 0.0
    %1960 = vmatpush2.msra.mxu0 0.0
    %1961 = vmatprep.subr.mxu0 0.0
    %1962 = vmatpush2.msra.mxu0 0.0
    %1963 = vmatprep.subr.mxu0 0.0
    %1964 = vmatpush2.msra.mxu0 0.0
    %1965 = vmatprep.subr.mxu0 0.0
    %1966 = vmatpush2.msra.mxu0 0.0
    %1967 = vmatprep.subr.mxu0 0.0
    %1968 = vmatpush2.msra.mxu0 0.0
    %1969 = vmatprep.subr.mxu0 0.0
    %1970 = vmatpush2.msra.mxu0 0.0
    %1971 = vmatprep.subr.mxu0 0.0
    %1972 = vmatpush2.msra.mxu0 0.0
    %1973 = vmatprep.subr.mxu0 0.0
    %1974 = vmatpush2.msra.mxu0 0.0
    %1975 = vmatprep.subr.mxu0 0.0
    %1976 = vmatpush2.msra.mxu0 0.0
    %1977 = vmatprep.subr.mxu0 0.0
    %1978 = vmatpush2.msra.mxu0 0.0
    %1979 = vmatprep.subr.mxu0 0.0
    %1980 = vmatpush2.msra.mxu0 0.0
    %1981 = vmatprep.subr.mxu0 0.0
    %1982 = vmatpush2.msra.mxu0 0.0
    %1983 = vmatprep.subr.mxu0 0.0
    %1984 = vmatpush2.msra.mxu0 0.0
    %1985 = vmatprep.subr.mxu0 0.0
    %1986 = vmatpush2.msra.mxu0 0.0
    %1987 = vmatprep.subr.mxu0 0.0
    %1988 = vmatpush2.msra.mxu0 0.0
    %1989 = vmatprep.mubr.f32.mxu0 0.0
    %1990 = vmatmul.mubr.f32.gmra.mxu0 %v1920
    %v1991 = vpop.f32.mrf.mxu0
    %v1992 = vadd.f32 0.0, %v1991
    %v1993 = vpop.f32.mrf.mxu0
    %1994 = vmatprep.mubr.f32.mxu0 0.0
    %1995 = vmatmul.mubr.f32.gmra.mxu0 %v1923
    %v1996 = vpop.f32.mrf.mxu0
    %v1997 = vadd.f32 0.0, %v1996
    %v1998 = vpop.f32.mrf.mxu0
    %1999 = vdwg.mxu0
    %v2000 = vrcp.pop %v1306
    %v2001 = vmul.f32 %v1425, %v2000
    %v2002 = vrcp.pop %v1309
    %v2003 = vmul.f32 %v1430, %v2002
    %v2004 = vrcp.pop %v1312
    %v2005 = vmul.f32 %v1506, %v2004
    %v2006 = vrcp.pop %v1315
    %v2007 = vmul.f32 %v1511, %v2006
    %v2008 = vrcp.pop %v1318
    %v2009 = vmul.f32 %v1587, %v2008
    %v2010 = vrcp.pop %v1321
    %v2011 = vmul.f32 %v1592, %v2010
    %v2012 = vrcp.pop %v1324
    %v2013 = vmul.f32 %v1668, %v2012
    %v2014 = vrcp.pop %v1327
    %v2015 = vmul.f32 %v1673, %v2014
    %v2016 = vrcp.pop %v1330
    %v2017 = vmul.f32 %v1749, %v2016
    %v2018 = vrcp.pop %v1333
    %v2019 = vmul.f32 %v1754, %v2018
    %v2020 = vrcp.pop %v1336
    %v2021 = vmul.f32 %v1830, %v2020
    %v2022 = vrcp.pop %v1339
    %v2023 = vmul.f32 %v1835, %v2022
    %v2024 = vrcp.pop %v1342
    %v2025 = vmul.f32 %v1911, %v2024
    %v2026 = vrcp.pop %v1345
    %v2027 = vmul.f32 %v1916, %v2026
    %v2028 = vrcp.pop %v1348
    %v2029 = vmul.f32 %v1992, %v2028
    %v2030 = vrcp.pop %v1351
    %v2031 = vmul.f32 %v1997, %v2030
    %2034 = vrot.lane.b32.xlu0 %v2005, 4
    %v2035 = vpop.permute.xlu0 %2034
    %2036 = vrot.lane.b32.xlu0 %v2007, 4
    %v2037 = vpop.permute.xlu0 %2036
    %2042 = vrot.lane.b32.xlu0 %v2009, 8
    %v2043 = vpop.permute.xlu0 %2042
    %2044 = vrot.lane.b32.xlu0 %v2011, 8
    %v2045 = vpop.permute.xlu0 %2044
    %2050 = vrot.lane.b32.xlu0 %v2013, 12
    %v2051 = vpop.permute.xlu0 %2050
    %2052 = vrot.lane.b32.xlu0 %v2015, 12
    %v2053 = vpop.permute.xlu0 %2052
    %2058 = vrot.lane.b32.xlu0 %v2017, 16
    %v2059 = vpop.permute.xlu0 %2058
    %2060 = vrot.lane.b32.xlu0 %v2019, 16
    %v2061 = vpop.permute.xlu0 %2060
    %2066 = vrot.lane.b32.xlu0 %v2021, 20
    %v2067 = vpop.permute.xlu0 %2066
    %2068 = vrot.lane.b32.xlu0 %v2023, 20
    %v2069 = vpop.permute.xlu0 %2068
    %2074 = vrot.lane.b32.xlu0 %v2025, 24
    %v2075 = vpop.permute.xlu0 %2074
    %2076 = vrot.lane.b32.xlu0 %v2027, 24
    %v2077 = vpop.permute.xlu0 %2076
    %2082 = vrot.lane.b32.xlu0 %v2029, 28
    %v2083 = vpop.permute.xlu0 %2082
    %2084 = vrot.lane.b32.xlu0 %v2031, 28
    %v2085 = vpop.permute.xlu0 %2084
    %v2088 = vsel %vm542, %v2001, %v2035
    %v2089 = vsel %vm542, %v2003, %v2037
    %vm2090 = vcmask 64512
    %v2091 = vsel %vm2090, %v2088, %v2043
    %v2092 = vsel %vm2090, %v2089, %v2045
    %vm2093 = vcmask 97280
    %v2094 = vsel %vm2093, %v2091, %v2051
    %v2095 = vsel %vm2093, %v2092, %v2053
    %v2096 = vsel %vm1207, %v2094, %v2059
    %v2097 = vsel %vm1207, %v2095, %v2061
    %vm2098 = vcmask 162816
    %v2099 = vsel %vm2098, %v2096, %v2067
    %v2100 = vsel %vm2098, %v2097, %v2069
    %vm2101 = vcmask 195584
    %v2102 = vsel %vm2101, %v2099, %v2075
    %v2103 = vsel %vm2101, %v2100, %v2077
    %vm2104 = vcmask 228352
    %v2105 = vsel %vm2104, %v2102, %v2083
    %v2106 = vsel %vm2104, %v2103, %v2085
    %v2107 = vld [vmem:[#allocation14] sm:$0xff]
    %v2108 = vld [vmem:[#allocation14 + $0x8] sm:$0xff]
    %v2109 = vld [vmem:[#allocation14 + $0x10] sm:$0xff]
    %v2110 = vld [vmem:[#allocation14 + $0x18] sm:$0xff]
    %v2111 = vld [vmem:[%s11] sm:$0x1]
    %v2113 = vlaneseq
    %v2114 = vshrl.u32 %v2113, 7
    %v2115 = vsub.s32 0, %v2114
    %v2116 = vrot.slane %v2111, %v2115
    %v2119 = vsel %vm170, %v2105, 0
    %v2122 = vsel %vm170, %v2106, 0
    %2124 = vmatprep.subr.mxu0 0.0
    %2125 = vmatpush1.msra.mxu0 0.0
    %2126 = vmatprep.subr.mxu0 0.0
    %2127 = vmatpush1.msra.mxu0 0.0
    %2128 = vmatprep.subr.mxu0 0.0
    %2129 = vmatpush1.msra.mxu0 0.0
    %2130 = vmatprep.subr.mxu0 0.0
    %2131 = vmatpush1.msra.mxu0 0.0
    %2132 = vmatprep.subr.mxu0 0.0
    %2133 = vmatpush1.msra.mxu0 0.0
    %2134 = vmatprep.subr.mxu0 0.0
    %2135 = vmatpush1.msra.mxu0 0.0
    %2136 = vmatprep.subr.mxu0 0.0
    %2137 = vmatpush1.msra.mxu0 0.0
    %2138 = vmatprep.subr.mxu0 0.0
    %2139 = vmatpush1.msra.mxu0 0.0
    %2140 = vmatprep.subr.mxu0 0.0
    %2141 = vmatpush1.msra.mxu0 0.0
    %2142 = vmatprep.subr.mxu0 0.0
    %2143 = vmatpush1.msra.mxu0 0.0
    %2144 = vmatprep.subr.mxu0 0.0
    %2145 = vmatpush1.msra.mxu0 0.0
    %2146 = vmatprep.subr.mxu0 0.0
    %2147 = vmatpush1.msra.mxu0 0.0
    %2148 = vmatprep.subr.mxu0 0.0
    %2149 = vmatpush1.msra.mxu0 %v2110
    %2150 = vmatprep.subr.mxu0 0.0
    %2151 = vmatpush1.msra.mxu0 %v2109
    %2152 = vmatprep.subr.mxu0 0.0
    %2153 = vmatpush1.msra.mxu0 %v2108
    %2154 = vmatprep.subr.mxu0 0.0
    %2155 = vmatpush1.msra.mxu0 %v2107
    %2156 = vmatprep.subr.mxu0 0.0
    %2157 = vmatpush2.msra.mxu0 0.0
    %2158 = vmatprep.subr.mxu0 0.0
    %2159 = vmatpush2.msra.mxu0 0.0
    %2160 = vmatprep.subr.mxu0 0.0
    %2161 = vmatpush2.msra.mxu0 0.0
    %2162 = vmatprep.subr.mxu0 0.0
    %2163 = vmatpush2.msra.mxu0 0.0
    %2164 = vmatprep.subr.mxu0 0.0
    %2165 = vmatpush2.msra.mxu0 0.0
    %2166 = vmatprep.subr.mxu0 0.0
    %2167 = vmatpush2.msra.mxu0 0.0
    %2168 = vmatprep.subr.mxu0 0.0
    %2169 = vmatpush2.msra.mxu0 0.0
    %2170 = vmatprep.subr.mxu0 0.0
    %2171 = vmatpush2.msra.mxu0 0.0
    %2172 = vmatprep.subr.mxu0 0.0
    %2173 = vmatpush2.msra.mxu0 0.0
    %2174 = vmatprep.subr.mxu0 0.0
    %2175 = vmatpush2.msra.mxu0 0.0
    %2176 = vmatprep.subr.mxu0 0.0
    %2177 = vmatpush2.msra.mxu0 0.0
    %2178 = vmatprep.subr.mxu0 0.0
    %2179 = vmatpush2.msra.mxu0 0.0
    %2180 = vmatprep.subr.mxu0 0.0
    %2181 = vmatpush2.msra.mxu0 0.0
    %2182 = vmatprep.subr.mxu0 0.0
    %2183 = vmatpush2.msra.mxu0 0.0
    %2184 = vmatprep.subr.mxu0 0.0
    %2185 = vmatpush2.msra.mxu0 0.0
    %2186 = vmatprep.subr.mxu0 0.0
    %2187 = vmatpush2.msra.mxu0 0.0
    %2188 = vmatprep.mubr.f32.mxu0 0.0
    %2189 = vmatmul.mubr.f32.gmra.mxu0 %v2119
    %v2190 = vpop.f32.mrf.mxu0
    %v2191 = vadd.f32 %v2116, %v2190
    %v2192 = vpop.f32.mrf.mxu0
    %2193 = vmatprep.mubr.f32.mxu0 0.0
    %2194 = vmatmul.mubr.f32.gmra.mxu0 %v2122
    %v2195 = vpop.f32.mrf.mxu0
    %v2196 = vadd.f32 %v2116, %v2195
    %v2197 = vpop.f32.mrf.mxu0
    %2198 = vdwg.mxu0
    %2199 = vst.msk [vmem:[#allocation16] sm:$0xff] %vm170, %v2191
    %2200 = vst.msk [vmem:[#allocation16 + $0x8] sm:$0xff] %vm170, %v2196
    // Predicated region
    $region82: #{tpu_custom_call.1} parent=1 // pred_check
      _
    $region83: #{tpu_custom_call.1} parent=1 // pred_check_branch
      %2202 = sbr.rel (0) target = $region85
    $region84: #{tpu_custom_call.1} parent=1 // pred_region
      %s2204 = ssub.s32 256, 256
      %2205 = vsyncadd [#allocation4], %s2204
      %s2206 = sshll.u32 [#allocation16], 4
      %s2207 = int_to_ptr.vmem [resolvable:$true] %s2206
      %2212 = dma.vmem_to_hbm [thread:$0]  %s2207, 256, %s12, [#allocation4], 128, 128, 8
    $region85: #{tpu_custom_call.1} parent=1 // pred_fallthru
      _
    // Predicated region
    $region86: #{tpu_custom_call.1} parent=1 // pred_check
      _
    $region87: #{tpu_custom_call.1} parent=1 // pred_check_branch
      %2214 = sbr.rel (0) target = $region89
    $region88: #{tpu_custom_call.1} parent=1 // pred_region
      %2215 = dma.done [#allocation4], 256
    $region89: #{tpu_custom_call.1} parent=1 // pred_fallthru
      _
    %2216 = vsyncpa [#allocation3], 1
    %2217 = vsyncpa [#allocation6], 1
    %2218 = vsyncpa [#allocation9], 1
    %2219 = vsyncpa [#allocation12], 1
    %2220 = vsyncpa [#allocation15], 1
    %2221 = vsyncpa [#allocation4], 1

</llo_original>
